<compile_context>
chip_gen: v5e
topology: v5e:2x2
jax: 0.10.0
libtpu: 0.0.40
codegen_flags: <defaults>
</compile_context>

<pallas_src>
import functools

import jax
import jax.numpy as jnp
from jax.experimental import pallas as pl
from jax.experimental.pallas import tpu as pltpu


# ---------------------------------------------------------------------------
# Hardware-aware sizing helpers
# ---------------------------------------------------------------------------
@functools.lru_cache(maxsize=None)
def _vmem_capacity_bytes() -> int:
    """Physical VMEM per core; falls back to 128 MiB if the query fails."""
    try:
        return int(pltpu.get_tpu_info().vmem_capacity_bytes)
    except Exception:
        return 128 * 1024 * 1024


def _vmem_limit_bytes() -> int:
    # Raise scoped VMEM above the conservative 16/32 MiB defaults but keep
    # headroom below the physical capacity (64 MiB on v7x, 128 MiB v5e/v6e).
    return int(_vmem_capacity_bytes() * 3 // 4)


def _pick_tile(n: int, cap: int) -> int:
    """Largest tile <= cap that divides n, preferring multiples of 8."""
    if n <= cap:
        return n
    for t in range(cap - (cap % 8), 7, -8):
        if n % t == 0:
            return t
    for t in range(cap, 0, -1):
        if n % t == 0:
            return t
    return n


def _pick_f_tile(f: int, cap: int) -> int:
    """Largest tile <= cap dividing f, preferring multiples of 128 (lanes)."""
    if f <= cap:
        return f
    for t in range(cap - (cap % 128), 127, -128):
        if f % t == 0:
            return t
    return _pick_tile(f, cap)


def _const_spec(shape):
    """Grid-invariant operand (same block at every grid point)."""
    n = len(shape)
    return pl.BlockSpec(shape, lambda *_, _n=n: (0,) * _n)


# ---------------------------------------------------------------------------
# Kernel 1: LayerNorm1 + fused QKV projection; q/k/v written head-major bf16.
# ---------------------------------------------------------------------------
def _ln_qkv_kernel(x_ref, g_ref, b_ref, wqkv_ref, bqkv_ref,
                   q_ref, k_ref, v_ref, *,
                   eps: float, embed_dim: int, num_heads: int, head_dim: int):
    x = x_ref[0]                                           # (tt, E) f32
    mu = jnp.mean(x, axis=-1, keepdims=True)
    xc = x - mu
    var = jnp.mean(xc * xc, axis=-1, keepdims=True)
    ln = xc * jax.lax.rsqrt(var + eps) * g_ref[...] + b_ref[...]

    # Fused q/k/v projection: bf16 operands, f32 accumulation on the MXU.
    qkv = jnp.dot(ln.astype(jnp.bfloat16), wqkv_ref[...],
                  preferred_element_type=jnp.float32) + bqkv_ref[...]

    E, D = embed_dim, head_dim
    for h in range(num_heads):                             # trace-time unroll
        lo = h * D
        q_ref[0, h] = qkv[:, lo:lo + D].astype(q_ref.dtype)
        k_ref[0, h] = qkv[:, E + lo:E + lo + D].astype(k_ref.dtype)
        v_ref[0, h] = qkv[:, 2 * E + lo:2 * E + lo + D].astype(v_ref.dtype)


# ---------------------------------------------------------------------------
# Kernel 2: attention, one (batch, q-tile, head) per grid step.  Out-proj +
# bias + residual folded into a (tq, E) f32 accumulator; single lane-dense
# output store after the last head.
# ---------------------------------------------------------------------------
def _attn_kernel(q_ref, k_ref, v_ref, x_ref, wo_ref, bo_ref, o_ref, acc_ref,
                 *, scale: float):
    h = pl.program_id(2)

    @pl.when(h == 0)
    def _():
        # residual + out-projection bias (added once).
        acc_ref[...] = x_ref[0] + bo_ref[...]

    q = q_ref[0, 0]                                        # (tq, D) bf16
    k = k_ref[0, 0]                                        # (T,  D) bf16
    v = v_ref[0, 0]                                        # (T,  D) bf16

    # scores = q @ k^T  (contraction over head_dim), f32 accumulation.
    s = jax.lax.dot_general(q, k, (((1,), (1,)), ((), ())),
                            preferred_element_type=jnp.float32) * scale
    s = s - jnp.max(s, axis=-1, keepdims=True)
    p = jnp.exp(s)
    p = p / jnp.sum(p, axis=-1, keepdims=True)             # exact softmax

    ctx = jnp.dot(p.astype(jnp.bfloat16), v,
                  preferred_element_type=jnp.float32)      # (tq, D) f32
    # Per-head slice of the out-projection: ctx_h @ Wo[h]  -> (tq, E)
    acc_ref[...] += jnp.dot(ctx.astype(jnp.bfloat16), wo_ref[0],
                            preferred_element_type=jnp.float32)

    @pl.when(h == pl.num_programs(2) - 1)
    def _():
        o_ref[0] = acc_ref[...].astype(o_ref.dtype)        # lane-dense store


# ---------------------------------------------------------------------------
# Kernel 3: LayerNorm2 + MLP (QuickGELU) + residual, tiled over the MLP
# hidden dimension F (w1/w2 streamed in F-slices, f32 accumulator).
# ---------------------------------------------------------------------------
def _mlp_kernel(h_ref, g2_ref, beta2_ref, w1_ref, b1_ref, w2_ref, b2_ref,
                o_ref, ln_ref, acc_ref, *, eps: float):
    f = pl.program_id(1)

    @pl.when(f == 0)
    def _():
        h = h_ref[...]                                     # (tm, E) f32
        mu = jnp.mean(h, axis=-1, keepdims=True)
        hc = h - mu
        var = jnp.mean(hc * hc, axis=-1, keepdims=True)
        ln = hc * jax.lax.rsqrt(var + eps) * g2_ref[...] + beta2_ref[...]
        ln_ref[...] = ln.astype(ln_ref.dtype)              # bf16 scratch
        acc_ref[...] = h + b2_ref[...]                     # residual + fc2 bias

    a = jnp.dot(ln_ref[...], w1_ref[...],
                preferred_element_type=jnp.float32) + b1_ref[...]
    # QuickGELU: a * sigmoid(1.702 * a)  (exact divide; exp uses the EUP)
    a = a / (1.0 + jnp.exp(-1.702 * a))
    acc_ref[...] += jnp.dot(a.astype(jnp.bfloat16), w2_ref[...],
                            preferred_element_type=jnp.float32)

    @pl.when(f == pl.num_programs(1) - 1)
    def _():
        o_ref[...] = acc_ref[...].astype(o_ref.dtype)


# ---------------------------------------------------------------------------
# Wrappers
# ---------------------------------------------------------------------------
def prepare_params(raw, num_heads: int):
    """One-time (model-load-time) preprocessing: transpose nn.Linear weights
    to [in, out], fuse q/k/v, split the out-projection per head, cast matmul
    weights to bf16, reshape vectors to (1, N)."""
    E = raw["q_w"].shape[0]
    F = raw["fc1_w"].shape[0]
    D = E // num_heads
    bf16, f32 = jnp.bfloat16, jnp.float32
    return {
        "wqkv": jnp.concatenate([raw["q_w"].T, raw["k_w"].T, raw["v_w"].T],
                                axis=1).astype(bf16),                 # (E, 3E)
        "bqkv": jnp.concatenate([raw["q_b"], raw["k_b"], raw["v_b"]]
                                ).reshape(1, 3 * E).astype(f32),
        "wo": raw["o_w"].T.reshape(num_heads, D, E).astype(bf16),     # (H,D,E)
        "bo": raw["o_b"].reshape(1, E).astype(f32),
        "w1": raw["fc1_w"].T.astype(bf16),                            # (E, F)
        "b1": raw["fc1_b"].reshape(1, F).astype(f32),
        "w2": raw["fc2_w"].T.astype(bf16),                            # (F, E)
        "b2": raw["fc2_b"].reshape(1, E).astype(f32),
        "ln1_g": raw["ln1_g"].reshape(1, E).astype(f32),
        "ln1_b": raw["ln1_b"].reshape(1, E).astype(f32),
        "ln2_g": raw["ln2_g"].reshape(1, E).astype(f32),
        "ln2_b": raw["ln2_b"].reshape(1, E).astype(f32),
    }


def encoder_layer_forward(x, p, *, num_heads: int, eps: float = 1e-5):
    """x: [B, T, E] float32.  p: output of prepare_params."""
    B, T, E = x.shape
    H = num_heads
    assert E % H == 0
    D = E // H
    scale = D ** (-0.5)
    F = p["w1"].shape[1]
    M = B * T
    f32, bf16 = jnp.float32, jnp.bfloat16

    small_vmem = _vmem_capacity_bytes() <= 64 * 1024 * 1024   # v7x: 64 MiB
    row_cap = 256 if small_vmem else 512
    vmem_limit = _vmem_limit_bytes()

    tt = _pick_tile(T, row_cap)        # K1 / K2 per-batch row (query) tile
    tm = _pick_tile(M, row_cap)        # K3 flattened-row tile
    tf = _pick_f_tile(F, 512 if small_vmem else 1024)
    tq = tt

    # ---- K1: LN1 + fused QKV projection (bf16, head-major outputs) ----
    qkv_out_spec = pl.BlockSpec((1, H, tt, D), lambda b, t: (b, 0, t, 0))
    q, k, v = pl.pallas_call(
        functools.partial(_ln_qkv_kernel, eps=eps, embed_dim=E,
                          num_heads=H, head_dim=D),
        grid=(B, T // tt),
        in_specs=[pl.BlockSpec((1, tt, E), lambda b, t: (b, t, 0)),
                  _const_spec((1, E)), _const_spec((1, E)),
                  _const_spec((E, 3 * E)), _const_spec((1, 3 * E))],
        out_specs=(qkv_out_spec, qkv_out_spec, qkv_out_spec),
        out_shape=(jax.ShapeDtypeStruct((B, H, T, D), bf16),) * 3,
        compiler_params=pltpu.CompilerParams(
            dimension_semantics=("parallel", "parallel"),
            vmem_limit_bytes=vmem_limit),
    )(x, p["ln1_g"], p["ln1_b"], p["wqkv"], p["bqkv"])

    # ---- K2: attention + folded out-projection + residual -> h1 (f32) ----
    h1 = pl.pallas_call(
        functools.partial(_attn_kernel, scale=scale),
        grid=(B, T // tq, H),
        in_specs=[
            pl.BlockSpec((1, 1, tq, D), lambda b, qi, h: (b, h, qi, 0)),
            pl.BlockSpec((1, 1, T, D), lambda b, qi, h: (b, h, 0, 0)),
            pl.BlockSpec((1, 1, T, D), lambda b, qi, h: (b, h, 0, 0)),
            pl.BlockSpec((1, tq, E), lambda b, qi, h: (b, qi, 0)),
            pl.BlockSpec((1, D, E), lambda b, qi, h: (h, 0, 0)),
            _const_spec((1, E)),
        ],
        out_specs=pl.BlockSpec((1, tq, E), lambda b, qi, h: (b, qi, 0)),
        out_shape=jax.ShapeDtypeStruct((B, T, E), f32),
        scratch_shapes=[pltpu.VMEM((tq, E), f32)],
        compiler_params=pltpu.CompilerParams(
            dimension_semantics=("parallel", "parallel", "arbitrary"),
            vmem_limit_bytes=vmem_limit),
    )(q, k, v, x, p["wo"], p["bo"])

    # ---- K3: LN2 + F-tiled MLP (QuickGELU) + residual over (B*T, E) rows ---
    y2d = pl.pallas_call(
        functools.partial(_mlp_kernel, eps=eps),
        grid=(M // tm, F // tf),
        in_specs=[
            pl.BlockSpec((tm, E), lambda i, f: (i, 0)),
            _const_spec((1, E)), _const_spec((1, E)),
            pl.BlockSpec((E, tf), lambda i, f: (0, f)),
            pl.BlockSpec((1, tf), lambda i, f: (0, f)),
            pl.BlockSpec((tf, E), lambda i, f: (f, 0)),
            _const_spec((1, E)),
        ],
        out_specs=pl.BlockSpec((tm, E), lambda i, f: (i, 0)),
        out_shape=jax.ShapeDtypeStruct((M, E), x.dtype),
        scratch_shapes=[pltpu.VMEM((tm, E), bf16),
                        pltpu.VMEM((tm, E), f32)],
        compiler_params=pltpu.CompilerParams(
            dimension_semantics=("parallel", "arbitrary"),
            vmem_limit_bytes=vmem_limit),
    )(h1.reshape(M, E), p["ln2_g"], p["ln2_b"],
      p["w1"], p["b1"], p["w2"], p["b2"])

    return y2d.reshape(B, T, E)


# ---------------------------------------------------------------------------
# Pure-JAX f32 reference mirroring the PyTorch EncoderLayer forward.
# ---------------------------------------------------------------------------
def _reference(x, p, *, num_heads: int, eps: float = 1e-5):
    B, T, E = x.shape
    D = E // num_heads
    scale = D ** (-0.5)

    def layer_norm(y, g, b):
        mu = jnp.mean(y, axis=-1, keepdims=True)
        var = jnp.mean((y - mu) ** 2, axis=-1, keepdims=True)
        return (y - mu) / jnp.sqrt(var + eps) * g + b

    def lin(y, w, b):
        return y @ w.T + b

    def split(t):
        return t.reshape(B, T, num_heads, D).transpose(0, 2, 1, 3)

    h = layer_norm(x, p["ln1_g"], p["ln1_b"])
    q = split(lin(h, p["q_w"], p["q_b"]))
    k = split(lin(h, p["k_w"], p["k_b"]))
    v = split(lin(h, p["v_w"], p["v_b"]))
    s = jnp.einsum("bhtd,bhsd->bhts", q, k) * scale
    a = jax.nn.softmax(s, axis=-1)
    ctx = jnp.einsum("bhts,bhsd->bhtd", a, v).transpose(0, 2, 1, 3).reshape(B, T, E)
    h1 = x + lin(ctx, p["o_w"], p["o_b"])
    g2 = layer_norm(h1, p["ln2_g"], p["ln2_b"])
    m = lin(g2, p["fc1_w"], p["fc1_b"])
    m = m * jax.nn.sigmoid(1.702 * m)
    m = lin(m, p["fc2_w"], p["fc2_b"])
    return h1 + m


if __name__ == "__main__":
    B, T, E, H, F = 2, 8, 32, 4, 128   # batch, seq, hidden, heads, mlp_dim

    key = jax.random.PRNGKey(0)
    ks = jax.random.split(key, 17)
    raw = {
        "q_w": jax.random.normal(ks[0], (E, E), jnp.float32) * 0.05,
        "q_b": jax.random.normal(ks[1], (E,), jnp.float32) * 0.05,
        "k_w": jax.random.normal(ks[2], (E, E), jnp.float32) * 0.05,
        "k_b": jax.random.normal(ks[3], (E,), jnp.float32) * 0.05,
        "v_w": jax.random.normal(ks[4], (E, E), jnp.float32) * 0.05,
        "v_b": jax.random.normal(ks[5], (E,), jnp.float32) * 0.05,
        "o_w": jax.random.normal(ks[6], (E, E), jnp.float32) * 0.05,
        "o_b": jax.random.normal(ks[7], (E,), jnp.float32) * 0.05,
        "fc1_w": jax.random.normal(ks[8], (F, E), jnp.float32) * 0.05,
        "fc1_b": jax.random.normal(ks[9], (F,), jnp.float32) * 0.05,
        "fc2_w": jax.random.normal(ks[10], (E, F), jnp.float32) * 0.05,
        "fc2_b": jax.random.normal(ks[11], (E,), jnp.float32) * 0.05,
        "ln1_g": 1.0 + jax.random.normal(ks[12], (E,), jnp.float32) * 0.05,
        "ln1_b": jax.random.normal(ks[13], (E,), jnp.float32) * 0.05,
        "ln2_g": 1.0 + jax.random.normal(ks[14], (E,), jnp.float32) * 0.05,
        "ln2_b": jax.random.normal(ks[15], (E,), jnp.float32) * 0.05,
    }
    x = jax.random.normal(ks[16], (B, T, E), jnp.float32)

    prepped = prepare_params(raw, H)          # load-time prep (no per-call work)
    fwd = jax.jit(functools.partial(encoder_layer_forward, num_heads=H))

    out = jax.block_until_ready(fwd(x, prepped))

    ref = _reference(x, raw, num_heads=H)
    assert out.shape == (B, T, E)
    max_err = float(jnp.max(jnp.abs(out - ref)))
    # bf16 matmul operands (f32 accumulation, exact softmax/sigmoid divides).
    assert jnp.allclose(out, ref, atol=2e-2, rtol=2e-2), f"mismatch: {max_err}"

    print("KERNEL_OK")
</pallas_src>

<mosaic_0001>
module attributes {stable_mosaic.version = 11 : i64} {
  func.func @_ln_qkv_kernel(%arg0: i32, %arg1: i32, %arg2: memref<1x8x32xf32, #tpu.memory_space<vmem>>, %arg3: memref<1x32xf32, #tpu.memory_space<vmem>>, %arg4: memref<1x32xf32, #tpu.memory_space<vmem>>, %arg5: memref<32x96xbf16, #tpu.memory_space<vmem>>, %arg6: memref<1x96xf32, #tpu.memory_space<vmem>>, %arg7: memref<1x4x8x8xbf16, #tpu.memory_space<vmem>>, %arg8: memref<1x4x8x8xbf16, #tpu.memory_space<vmem>>, %arg9: memref<1x4x8x8xbf16, #tpu.memory_space<vmem>>) attributes {dimension_semantics = [#tpu.dimension_semantics<parallel>, #tpu.dimension_semantics<parallel>], iteration_bounds = array<i64: 2, 1>, scalar_prefetch = 0 : i64, scratch_operands = 0 : i64, tpu.core_type = #tpu.core_type<tc>, window_params = [{transform_indices = @transform_0, window_bounds = array<i64: 1, 8, 32>}, {pipeline_mode = #tpu.pipeline_mode<synchronous>, transform_indices = @transform_1, window_bounds = array<i64: 1, 32>}, {pipeline_mode = #tpu.pipeline_mode<synchronous>, transform_indices = @transform_2, window_bounds = array<i64: 1, 32>}, {pipeline_mode = #tpu.pipeline_mode<synchronous>, transform_indices = @transform_3, window_bounds = array<i64: 32, 96>}, {pipeline_mode = #tpu.pipeline_mode<synchronous>, transform_indices = @transform_4, window_bounds = array<i64: 1, 96>}, {transform_indices = @transform_5, window_bounds = array<i64: 1, 4, 8, 8>}, {transform_indices = @transform_6, window_bounds = array<i64: 1, 4, 8, 8>}, {transform_indices = @transform_7, window_bounds = array<i64: 1, 4, 8, 8>}]} {
    %c0 = arith.constant 0 : index
    %c0_0 = arith.constant 0 : index
    %c0_1 = arith.constant 0 : index
    %0 = vector.load %arg2[%c0, %c0_0, %c0_1] : memref<1x8x32xf32, #tpu.memory_space<vmem>>, vector<1x8x32xf32>
    %1 = vector.shape_cast %0 : vector<1x8x32xf32> to vector<8x32xf32>
    %cst = arith.constant dense<0.000000e+00> : vector<8xf32>
    %2 = vector.multi_reduction <add>, %1, %cst [1] : vector<8x32xf32> to vector<8xf32>
    %3 = vector.shape_cast %2 : vector<8xf32> to vector<8x1xf32>
    %cst_2 = arith.constant 3.200000e+01 : f32
    %4 = vector.broadcast %cst_2 : f32 to vector<8x1xf32>
    %5 = arith.divf %3, %4 : vector<8x1xf32>
    %6 = vector.broadcast %5 : vector<8x1xf32> to vector<8x32xf32>
    %7 = arith.subf %1, %6 : vector<8x32xf32>
    %8 = arith.mulf %7, %7 : vector<8x32xf32>
    %cst_3 = arith.constant dense<0.000000e+00> : vector<8xf32>
    %9 = vector.multi_reduction <add>, %8, %cst_3 [1] : vector<8x32xf32> to vector<8xf32>
    %10 = vector.shape_cast %9 : vector<8xf32> to vector<8x1xf32>
    %cst_4 = arith.constant 3.200000e+01 : f32
    %11 = vector.broadcast %cst_4 : f32 to vector<8x1xf32>
    %12 = arith.divf %10, %11 : vector<8x1xf32>
    %cst_5 = arith.constant 9.99999974E-6 : f32
    %13 = vector.broadcast %cst_5 : f32 to vector<8x1xf32>
    %14 = arith.addf %12, %13 : vector<8x1xf32>
    %15 = math.rsqrt %14 : vector<8x1xf32>
    %16 = vector.broadcast %15 : vector<8x1xf32> to vector<8x32xf32>
    %17 = arith.mulf %7, %16 : vector<8x32xf32>
    %c0_6 = arith.constant 0 : index
    %c0_7 = arith.constant 0 : index
    %18 = vector.load %arg3[%c0_6, %c0_7] : memref<1x32xf32, #tpu.memory_space<vmem>>, vector<1x32xf32>
    %19 = vector.broadcast %18 : vector<1x32xf32> to vector<8x32xf32>
    %20 = arith.mulf %17, %19 : vector<8x32xf32>
    %c0_8 = arith.constant 0 : index
    %c0_9 = arith.constant 0 : index
    %21 = vector.load %arg4[%c0_8, %c0_9] : memref<1x32xf32, #tpu.memory_space<vmem>>, vector<1x32xf32>
    %22 = vector.broadcast %21 : vector<1x32xf32> to vector<8x32xf32>
    %23 = arith.addf %20, %22 : vector<8x32xf32>
    %24 = arith.truncf %23 : vector<8x32xf32> to vector<8x32xbf16>
    %c0_10 = arith.constant 0 : index
    %c0_11 = arith.constant 0 : index
    %25 = vector.load %arg5[%c0_10, %c0_11] : memref<32x96xbf16, #tpu.memory_space<vmem>>, vector<32x96xbf16>
    %cst_12 = arith.constant dense<0.000000e+00> : vector<8x96xf32>
    %26 = tpu.matmul %24, %25, %cst_12 {dimension_numbers = #tpu.dot_dimension_numbers<[1], [0], [0], [1], [0, 0, 1, 1], [], []>} : vector<8x32xbf16>, vector<32x96xbf16>, vector<8x96xf32> -> vector<8x96xf32>
    %c0_13 = arith.constant 0 : index
    %c0_14 = arith.constant 0 : index
    %27 = vector.load %arg6[%c0_13, %c0_14] : memref<1x96xf32, #tpu.memory_space<vmem>>, vector<1x96xf32>
    %28 = vector.broadcast %27 : vector<1x96xf32> to vector<8x96xf32>
    %29 = arith.addf %26, %28 : vector<8x96xf32>
    %30 = vector.extract_strided_slice %29 {offsets = [0, 0], sizes = [8, 8], strides = [1, 1]} : vector<8x96xf32> to vector<8x8xf32>
    %31 = arith.truncf %30 : vector<8x8xf32> to vector<8x8xbf16>
    %c0_15 = arith.constant 0 : index
    %c0_16 = arith.constant 0 : index
    %c0_17 = arith.constant 0 : index
    %c0_18 = arith.constant 0 : index
    %32 = vector.load %arg7[%c0_15, %c0_16, %c0_17, %c0_18] : memref<1x4x8x8xbf16, #tpu.memory_space<vmem>>, vector<1x1x8x8xbf16>
    %33 = vector.shape_cast %32 : vector<1x1x8x8xbf16> to vector<8x8xbf16>
    %34 = vector.shape_cast %31 : vector<8x8xbf16> to vector<1x1x8x8xbf16>
    tpu.vector_store %arg7[%c0_15, %c0_16, %c0_17, %c0_18], %34 {strides = array<i32>} : memref<1x4x8x8xbf16, #tpu.memory_space<vmem>>, vector<1x1x8x8xbf16>,
    %35 = vector.extract_strided_slice %29 {offsets = [0, 32], sizes = [8, 8], strides = [1, 1]} : vector<8x96xf32> to vector<8x8xf32>
    %36 = arith.truncf %35 : vector<8x8xf32> to vector<8x8xbf16>
    %c0_19 = arith.constant 0 : index
    %c0_20 = arith.constant 0 : index
    %c0_21 = arith.constant 0 : index
    %c0_22 = arith.constant 0 : index
    %37 = vector.load %arg8[%c0_19, %c0_20, %c0_21, %c0_22] : memref<1x4x8x8xbf16, #tpu.memory_space<vmem>>, vector<1x1x8x8xbf16>
    %38 = vector.shape_cast %37 : vector<1x1x8x8xbf16> to vector<8x8xbf16>
    %39 = vector.shape_cast %36 : vector<8x8xbf16> to vector<1x1x8x8xbf16>
    tpu.vector_store %arg8[%c0_19, %c0_20, %c0_21, %c0_22], %39 {strides = array<i32>} : memref<1x4x8x8xbf16, #tpu.memory_space<vmem>>, vector<1x1x8x8xbf16>,
    %40 = vector.extract_strided_slice %29 {offsets = [0, 64], sizes = [8, 8], strides = [1, 1]} : vector<8x96xf32> to vector<8x8xf32>
    %41 = arith.truncf %40 : vector<8x8xf32> to vector<8x8xbf16>
    %c0_23 = arith.constant 0 : index
    %c0_24 = arith.constant 0 : index
    %c0_25 = arith.constant 0 : index
    %c0_26 = arith.constant 0 : index
    %42 = vector.load %arg9[%c0_23, %c0_24, %c0_25, %c0_26] : memref<1x4x8x8xbf16, #tpu.memory_space<vmem>>, vector<1x1x8x8xbf16>
    %43 = vector.shape_cast %42 : vector<1x1x8x8xbf16> to vector<8x8xbf16>
    %44 = vector.shape_cast %41 : vector<8x8xbf16> to vector<1x1x8x8xbf16>
    tpu.vector_store %arg9[%c0_23, %c0_24, %c0_25, %c0_26], %44 {strides = array<i32>} : memref<1x4x8x8xbf16, #tpu.memory_space<vmem>>, vector<1x1x8x8xbf16>,
    %45 = vector.extract_strided_slice %29 {offsets = [0, 8], sizes = [8, 8], strides = [1, 1]} : vector<8x96xf32> to vector<8x8xf32>
    %46 = arith.truncf %45 : vector<8x8xf32> to vector<8x8xbf16>
    %c0_27 = arith.constant 0 : index
    %c1 = arith.constant 1 : index
    %c0_28 = arith.constant 0 : index
    %c0_29 = arith.constant 0 : index
    %47 = vector.load %arg7[%c0_27, %c1, %c0_28, %c0_29] : memref<1x4x8x8xbf16, #tpu.memory_space<vmem>>, vector<1x1x8x8xbf16>
    %48 = vector.shape_cast %47 : vector<1x1x8x8xbf16> to vector<8x8xbf16>
    %49 = vector.shape_cast %46 : vector<8x8xbf16> to vector<1x1x8x8xbf16>
    tpu.vector_store %arg7[%c0_27, %c1, %c0_28, %c0_29], %49 {strides = array<i32>} : memref<1x4x8x8xbf16, #tpu.memory_space<vmem>>, vector<1x1x8x8xbf16>,
    %50 = vector.extract_strided_slice %29 {offsets = [0, 40], sizes = [8, 8], strides = [1, 1]} : vector<8x96xf32> to vector<8x8xf32>
    %51 = arith.truncf %50 : vector<8x8xf32> to vector<8x8xbf16>
    %c0_30 = arith.constant 0 : index
    %c1_31 = arith.constant 1 : index
    %c0_32 = arith.constant 0 : index
    %c0_33 = arith.constant 0 : index
    %52 = vector.load %arg8[%c0_30, %c1_31, %c0_32, %c0_33] : memref<1x4x8x8xbf16, #tpu.memory_space<vmem>>, vector<1x1x8x8xbf16>
    %53 = vector.shape_cast %52 : vector<1x1x8x8xbf16> to vector<8x8xbf16>
    %54 = vector.shape_cast %51 : vector<8x8xbf16> to vector<1x1x8x8xbf16>
    tpu.vector_store %arg8[%c0_30, %c1_31, %c0_32, %c0_33], %54 {strides = array<i32>} : memref<1x4x8x8xbf16, #tpu.memory_space<vmem>>, vector<1x1x8x8xbf16>,
    %55 = vector.extract_strided_slice %29 {offsets = [0, 72], sizes = [8, 8], strides = [1, 1]} : vector<8x96xf32> to vector<8x8xf32>
    %56 = arith.truncf %55 : vector<8x8xf32> to vector<8x8xbf16>
    %c0_34 = arith.constant 0 : index
    %c1_35 = arith.constant 1 : index
    %c0_36 = arith.constant 0 : index
    %c0_37 = arith.constant 0 : index
    %57 = vector.load %arg9[%c0_34, %c1_35, %c0_36, %c0_37] : memref<1x4x8x8xbf16, #tpu.memory_space<vmem>>, vector<1x1x8x8xbf16>
    %58 = vector.shape_cast %57 : vector<1x1x8x8xbf16> to vector<8x8xbf16>
    %59 = vector.shape_cast %56 : vector<8x8xbf16> to vector<1x1x8x8xbf16>
    tpu.vector_store %arg9[%c0_34, %c1_35, %c0_36, %c0_37], %59 {strides = array<i32>} : memref<1x4x8x8xbf16, #tpu.memory_space<vmem>>, vector<1x1x8x8xbf16>,
    %60 = vector.extract_strided_slice %29 {offsets = [0, 16], sizes = [8, 8], strides = [1, 1]} : vector<8x96xf32> to vector<8x8xf32>
    %61 = arith.truncf %60 : vector<8x8xf32> to vector<8x8xbf16>
    %c0_38 = arith.constant 0 : index
    %c2 = arith.constant 2 : index
    %c0_39 = arith.constant 0 : index
    %c0_40 = arith.constant 0 : index
    %62 = vector.load %arg7[%c0_38, %c2, %c0_39, %c0_40] : memref<1x4x8x8xbf16, #tpu.memory_space<vmem>>, vector<1x1x8x8xbf16>
    %63 = vector.shape_cast %62 : vector<1x1x8x8xbf16> to vector<8x8xbf16>
    %64 = vector.shape_cast %61 : vector<8x8xbf16> to vector<1x1x8x8xbf16>
    tpu.vector_store %arg7[%c0_38, %c2, %c0_39, %c0_40], %64 {strides = array<i32>} : memref<1x4x8x8xbf16, #tpu.memory_space<vmem>>, vector<1x1x8x8xbf16>,
    %65 = vector.extract_strided_slice %29 {offsets = [0, 48], sizes = [8, 8], strides = [1, 1]} : vector<8x96xf32> to vector<8x8xf32>
    %66 = arith.truncf %65 : vector<8x8xf32> to vector<8x8xbf16>
    %c0_41 = arith.constant 0 : index
    %c2_42 = arith.constant 2 : index
    %c0_43 = arith.constant 0 : index
    %c0_44 = arith.constant 0 : index
    %67 = vector.load %arg8[%c0_41, %c2_42, %c0_43, %c0_44] : memref<1x4x8x8xbf16, #tpu.memory_space<vmem>>, vector<1x1x8x8xbf16>
    %68 = vector.shape_cast %67 : vector<1x1x8x8xbf16> to vector<8x8xbf16>
    %69 = vector.shape_cast %66 : vector<8x8xbf16> to vector<1x1x8x8xbf16>
    tpu.vector_store %arg8[%c0_41, %c2_42, %c0_43, %c0_44], %69 {strides = array<i32>} : memref<1x4x8x8xbf16, #tpu.memory_space<vmem>>, vector<1x1x8x8xbf16>,
    %70 = vector.extract_strided_slice %29 {offsets = [0, 80], sizes = [8, 8], strides = [1, 1]} : vector<8x96xf32> to vector<8x8xf32>
    %71 = arith.truncf %70 : vector<8x8xf32> to vector<8x8xbf16>
    %c0_45 = arith.constant 0 : index
    %c2_46 = arith.constant 2 : index
    %c0_47 = arith.constant 0 : index
    %c0_48 = arith.constant 0 : index
    %72 = vector.load %arg9[%c0_45, %c2_46, %c0_47, %c0_48] : memref<1x4x8x8xbf16, #tpu.memory_space<vmem>>, vector<1x1x8x8xbf16>
    %73 = vector.shape_cast %72 : vector<1x1x8x8xbf16> to vector<8x8xbf16>
    %74 = vector.shape_cast %71 : vector<8x8xbf16> to vector<1x1x8x8xbf16>
    tpu.vector_store %arg9[%c0_45, %c2_46, %c0_47, %c0_48], %74 {strides = array<i32>} : memref<1x4x8x8xbf16, #tpu.memory_space<vmem>>, vector<1x1x8x8xbf16>,
    %75 = vector.extract_strided_slice %29 {offsets = [0, 24], sizes = [8, 8], strides = [1, 1]} : vector<8x96xf32> to vector<8x8xf32>
    %76 = arith.truncf %75 : vector<8x8xf32> to vector<8x8xbf16>
    %c0_49 = arith.constant 0 : index
    %c3 = arith.constant 3 : index
    %c0_50 = arith.constant 0 : index
    %c0_51 = arith.constant 0 : index
    %77 = vector.load %arg7[%c0_49, %c3, %c0_50, %c0_51] : memref<1x4x8x8xbf16, #tpu.memory_space<vmem>>, vector<1x1x8x8xbf16>
    %78 = vector.shape_cast %77 : vector<1x1x8x8xbf16> to vector<8x8xbf16>
    %79 = vector.shape_cast %76 : vector<8x8xbf16> to vector<1x1x8x8xbf16>
    tpu.vector_store %arg7[%c0_49, %c3, %c0_50, %c0_51], %79 {strides = array<i32>} : memref<1x4x8x8xbf16, #tpu.memory_space<vmem>>, vector<1x1x8x8xbf16>,
    %80 = vector.extract_strided_slice %29 {offsets = [0, 56], sizes = [8, 8], strides = [1, 1]} : vector<8x96xf32> to vector<8x8xf32>
    %81 = arith.truncf %80 : vector<8x8xf32> to vector<8x8xbf16>
    %c0_52 = arith.constant 0 : index
    %c3_53 = arith.constant 3 : index
    %c0_54 = arith.constant 0 : index
    %c0_55 = arith.constant 0 : index
    %82 = vector.load %arg8[%c0_52, %c3_53, %c0_54, %c0_55] : memref<1x4x8x8xbf16, #tpu.memory_space<vmem>>, vector<1x1x8x8xbf16>
    %83 = vector.shape_cast %82 : vector<1x1x8x8xbf16> to vector<8x8xbf16>
    %84 = vector.shape_cast %81 : vector<8x8xbf16> to vector<1x1x8x8xbf16>
    tpu.vector_store %arg8[%c0_52, %c3_53, %c0_54, %c0_55], %84 {strides = array<i32>} : memref<1x4x8x8xbf16, #tpu.memory_space<vmem>>, vector<1x1x8x8xbf16>,
    %85 = vector.extract_strided_slice %29 {offsets = [0, 88], sizes = [8, 8], strides = [1, 1]} : vector<8x96xf32> to vector<8x8xf32>
    %86 = arith.truncf %85 : vector<8x8xf32> to vector<8x8xbf16>
    %c0_56 = arith.constant 0 : index
    %c3_57 = arith.constant 3 : index
    %c0_58 = arith.constant 0 : index
    %c0_59 = arith.constant 0 : index
    %87 = vector.load %arg9[%c0_56, %c3_57, %c0_58, %c0_59] : memref<1x4x8x8xbf16, #tpu.memory_space<vmem>>, vector<1x1x8x8xbf16>
    %88 = vector.shape_cast %87 : vector<1x1x8x8xbf16> to vector<8x8xbf16>
    %89 = vector.shape_cast %86 : vector<8x8xbf16> to vector<1x1x8x8xbf16>
    tpu.vector_store %arg9[%c0_56, %c3_57, %c0_58, %c0_59], %89 {strides = array<i32>} : memref<1x4x8x8xbf16, #tpu.memory_space<vmem>>, vector<1x1x8x8xbf16>,
    return
  }
  func.func @transform_0(%arg0: i32, %arg1: i32) -> (i32, i32, i32) {
    %c0_i32 = arith.constant 0 : i32
    %c0_i32_0 = arith.constant 0 : i32
    return %arg0, %arg1, %c0_i32 : i32, i32, i32
  }
  func.func @transform_1(%arg0: i32, %arg1: i32) -> (i32, i32) {
    %c0_i32 = arith.constant 0 : i32
    %c0_i32_0 = arith.constant 0 : i32
    %c0_i32_1 = arith.constant 0 : i32
    return %c0_i32, %c0_i32_0 : i32, i32
  }
  func.func @transform_2(%arg0: i32, %arg1: i32) -> (i32, i32) {
    %c0_i32 = arith.constant 0 : i32
    %c0_i32_0 = arith.constant 0 : i32
    %c0_i32_1 = arith.constant 0 : i32
    return %c0_i32, %c0_i32_0 : i32, i32
  }
  func.func @transform_3(%arg0: i32, %arg1: i32) -> (i32, i32) {
    %c0_i32 = arith.constant 0 : i32
    %c0_i32_0 = arith.constant 0 : i32
    %c0_i32_1 = arith.constant 0 : i32
    return %c0_i32, %c0_i32_0 : i32, i32
  }
  func.func @transform_4(%arg0: i32, %arg1: i32) -> (i32, i32) {
    %c0_i32 = arith.constant 0 : i32
    %c0_i32_0 = arith.constant 0 : i32
    %c0_i32_1 = arith.constant 0 : i32
    return %c0_i32, %c0_i32_0 : i32, i32
  }
  func.func @transform_5(%arg0: i32, %arg1: i32) -> (i32, i32, i32, i32) {
    %c0_i32 = arith.constant 0 : i32
    %c0_i32_0 = arith.constant 0 : i32
    %c0_i32_1 = arith.constant 0 : i32
    return %arg0, %c0_i32, %arg1, %c0_i32_0 : i32, i32, i32, i32
  }
  func.func @transform_6(%arg0: i32, %arg1: i32) -> (i32, i32, i32, i32) {
    %c0_i32 = arith.constant 0 : i32
    %c0_i32_0 = arith.constant 0 : i32
    %c0_i32_1 = arith.constant 0 : i32
    return %arg0, %c0_i32, %arg1, %c0_i32_0 : i32, i32, i32, i32
  }
  func.func @transform_7(%arg0: i32, %arg1: i32) -> (i32, i32, i32, i32) {
    %c0_i32 = arith.constant 0 : i32
    %c0_i32_0 = arith.constant 0 : i32
    %c0_i32_1 = arith.constant 0 : i32
    return %arg0, %c0_i32, %arg1, %c0_i32_0 : i32, i32, i32, i32
  }
}

module attributes {stable_mosaic.version = 11 : i64} {
  func.func @_attn_kernel(%arg0: i32, %arg1: i32, %arg2: i32, %arg3: memref<1x1x8x8xbf16, #tpu.memory_space<vmem>>, %arg4: memref<1x1x8x8xbf16, #tpu.memory_space<vmem>>, %arg5: memref<1x1x8x8xbf16, #tpu.memory_space<vmem>>, %arg6: memref<1x8x32xf32, #tpu.memory_space<vmem>>, %arg7: memref<1x8x32xbf16, #tpu.memory_space<vmem>>, %arg8: memref<1x32xf32, #tpu.memory_space<vmem>>, %arg9: memref<1x8x32xf32, #tpu.memory_space<vmem>>, %arg10: memref<8x32xf32, #tpu.memory_space<vmem>>) attributes {dimension_semantics = [#tpu.dimension_semantics<parallel>, #tpu.dimension_semantics<parallel>, #tpu.dimension_semantics<arbitrary>], iteration_bounds = array<i64: 2, 1, 4>, scalar_prefetch = 0 : i64, scratch_operands = 1 : i64, tpu.core_type = #tpu.core_type<tc>, window_params = [{transform_indices = @transform_0, window_bounds = array<i64: 1, 1, 8, 8>}, {transform_indices = @transform_1, window_bounds = array<i64: 1, 1, 8, 8>}, {transform_indices = @transform_2, window_bounds = array<i64: 1, 1, 8, 8>}, {transform_indices = @transform_3, window_bounds = array<i64: 1, 8, 32>}, {transform_indices = @transform_4, window_bounds = array<i64: 1, 8, 32>}, {pipeline_mode = #tpu.pipeline_mode<synchronous>, transform_indices = @transform_5, window_bounds = array<i64: 1, 32>}, {transform_indices = @transform_6, window_bounds = array<i64: 1, 8, 32>}]} {
    %c0_i32 = arith.constant 0 : i32
    %0 = arith.cmpi eq, %arg2, %c0_i32 : i32
    %1 = arith.extui %0 : i1 to i32
    %c0_i32_0 = arith.constant 0 : i32
    %2 = arith.cmpi ne, %1, %c0_i32_0 : i32
    scf.if %2 {
      %c0_25 = arith.constant 0 : index
      %c0_26 = arith.constant 0 : index
      %c0_27 = arith.constant 0 : index
      %33 = vector.load %arg6[%c0_25, %c0_26, %c0_27] : memref<1x8x32xf32, #tpu.memory_space<vmem>>, vector<1x8x32xf32>
      %34 = vector.shape_cast %33 : vector<1x8x32xf32> to vector<8x32xf32>
      %c0_28 = arith.constant 0 : index
      %c0_29 = arith.constant 0 : index
      %35 = vector.load %arg8[%c0_28, %c0_29] : memref<1x32xf32, #tpu.memory_space<vmem>>, vector<1x32xf32>
      %36 = vector.broadcast %35 : vector<1x32xf32> to vector<8x32xf32>
      %37 = arith.addf %34, %36 : vector<8x32xf32>
      %c0_30 = arith.constant 0 : index
      %c0_31 = arith.constant 0 : index
      %38 = vector.load %arg10[%c0_30, %c0_31] : memref<8x32xf32, #tpu.memory_space<vmem>>, vector<8x32xf32>
      tpu.vector_store %arg10[%c0_30, %c0_31], %37 {strides = array<i32>} : memref<8x32xf32, #tpu.memory_space<vmem>>, vector<8x32xf32>,
    } else {
    }
    %c0 = arith.constant 0 : index
    %c0_1 = arith.constant 0 : index
    %c0_2 = arith.constant 0 : index
    %c0_3 = arith.constant 0 : index
    %3 = vector.load %arg3[%c0, %c0_1, %c0_2, %c0_3] : memref<1x1x8x8xbf16, #tpu.memory_space<vmem>>, vector<1x1x8x8xbf16>
    %4 = vector.shape_cast %3 : vector<1x1x8x8xbf16> to vector<8x8xbf16>
    %c0_4 = arith.constant 0 : index
    %c0_5 = arith.constant 0 : index
    %c0_6 = arith.constant 0 : index
    %c0_7 = arith.constant 0 : index
    %5 = vector.load %arg4[%c0_4, %c0_5, %c0_6, %c0_7] : memref<1x1x8x8xbf16, #tpu.memory_space<vmem>>, vector<1x1x8x8xbf16>
    %6 = vector.shape_cast %5 : vector<1x1x8x8xbf16> to vector<8x8xbf16>
    %c0_8 = arith.constant 0 : index
    %c0_9 = arith.constant 0 : index
    %c0_10 = arith.constant 0 : index
    %c0_11 = arith.constant 0 : index
    %7 = vector.load %arg5[%c0_8, %c0_9, %c0_10, %c0_11] : memref<1x1x8x8xbf16, #tpu.memory_space<vmem>>, vector<1x1x8x8xbf16>
    %8 = vector.shape_cast %7 : vector<1x1x8x8xbf16> to vector<8x8xbf16>
    %cst = arith.constant dense<0.000000e+00> : vector<8x8xf32>
    %9 = tpu.matmul %4, %6, %cst {dimension_numbers = #tpu.dot_dimension_numbers<[1], [1], [0], [0], [0, 0, 1, 0], [], []>} : vector<8x8xbf16>, vector<8x8xbf16>, vector<8x8xf32> -> vector<8x8xf32>
    %cst_12 = arith.constant 0.353553385 : f32
    %10 = vector.broadcast %cst_12 : f32 to vector<8x8xf32>
    %11 = arith.mulf %9, %10 : vector<8x8xf32>
    %cst_13 = arith.constant dense<0xFF800000> : vector<8xf32>
    %12 = vector.multi_reduction <maximumf>, %11, %cst_13 [1] : vector<8x8xf32> to vector<8xf32>
    %13 = vector.shape_cast %12 : vector<8xf32> to vector<8x1xf32>
    %14 = vector.broadcast %13 : vector<8x1xf32> to vector<8x8xf32>
    %15 = arith.subf %11, %14 : vector<8x8xf32>
    %16 = math.exp %15 : vector<8x8xf32>
    %cst_14 = arith.constant dense<0.000000e+00> : vector<8xf32>
    %17 = vector.multi_reduction <add>, %16, %cst_14 [1] : vector<8x8xf32> to vector<8xf32>
    %18 = vector.shape_cast %17 : vector<8xf32> to vector<8x1xf32>
    %19 = vector.broadcast %18 : vector<8x1xf32> to vector<8x8xf32>
    %20 = arith.divf %16, %19 : vector<8x8xf32>
    %21 = arith.truncf %20 : vector<8x8xf32> to vector<8x8xbf16>
    %cst_15 = arith.constant dense<0.000000e+00> : vector<8x8xf32>
    %22 = tpu.matmul %21, %8, %cst_15 {dimension_numbers = #tpu.dot_dimension_numbers<[1], [0], [0], [1], [0, 0, 1, 1], [], []>} : vector<8x8xbf16>, vector<8x8xbf16>, vector<8x8xf32> -> vector<8x8xf32>
    %c0_16 = arith.constant 0 : index
    %c0_17 = arith.constant 0 : index
    %23 = vector.load %arg10[%c0_16, %c0_17] : memref<8x32xf32, #tpu.memory_space<vmem>>, vector<8x32xf32>
    %24 = arith.truncf %22 : vector<8x8xf32> to vector<8x8xbf16>
    %c0_18 = arith.constant 0 : index
    %c0_19 = arith.constant 0 : index
    %c0_20 = arith.constant 0 : index
    %25 = vector.load %arg7[%c0_18, %c0_19, %c0_20] : memref<1x8x32xbf16, #tpu.memory_space<vmem>>, vector<1x8x32xbf16>
    %26 = vector.shape_cast %25 : vector<1x8x32xbf16> to vector<8x32xbf16>
    %cst_21 = arith.constant dense<0.000000e+00> : vector<8x32xf32>
    %27 = tpu.matmul %24, %26, %cst_21 {dimension_numbers = #tpu.dot_dimension_numbers<[1], [0], [0], [1], [0, 0, 1, 1], [], []>} : vector<8x8xbf16>, vector<8x32xbf16>, vector<8x32xf32> -> vector<8x32xf32>
    %28 = arith.addf %23, %27 : vector<8x32xf32>
    %c0_22 = arith.constant 0 : index
    %c0_23 = arith.constant 0 : index
    %29 = vector.load %arg10[%c0_22, %c0_23] : memref<8x32xf32, #tpu.memory_space<vmem>>, vector<8x32xf32>
    tpu.vector_store %arg10[%c0_22, %c0_23], %28 {strides = array<i32>} : memref<8x32xf32, #tpu.memory_space<vmem>>, vector<8x32xf32>,
    %c3_i32 = arith.constant 3 : i32
    %30 = arith.cmpi eq, %arg2, %c3_i32 : i32
    %31 = arith.extui %30 : i1 to i32
    %c0_i32_24 = arith.constant 0 : i32
    %32 = arith.cmpi ne, %31, %c0_i32_24 : i32
    scf.if %32 {
      %c0_25 = arith.constant 0 : index
      %c0_26 = arith.constant 0 : index
      %33 = vector.load %arg10[%c0_25, %c0_26] : memref<8x32xf32, #tpu.memory_space<vmem>>, vector<8x32xf32>
      %c0_27 = arith.constant 0 : index
      %c0_28 = arith.constant 0 : index
      %c0_29 = arith.constant 0 : index
      %34 = vector.load %arg9[%c0_27, %c0_28, %c0_29] : memref<1x8x32xf32, #tpu.memory_space<vmem>>, vector<1x8x32xf32>
      %35 = vector.shape_cast %34 : vector<1x8x32xf32> to vector<8x32xf32>
      %36 = vector.shape_cast %33 : vector<8x32xf32> to vector<1x8x32xf32>
      tpu.vector_store %arg9[%c0_27, %c0_28, %c0_29], %36 {strides = array<i32>} : memref<1x8x32xf32, #tpu.memory_space<vmem>>, vector<1x8x32xf32>,
    } else {
    }
    return
  }
  func.func @transform_0(%arg0: i32, %arg1: i32, %arg2: i32) -> (i32, i32, i32, i32) {
    %c0_i32 = arith.constant 0 : i32
    %c0_i32_0 = arith.constant 0 : i32
    return %arg0, %arg2, %arg1, %c0_i32 : i32, i32, i32, i32
  }
  func.func @transform_1(%arg0: i32, %arg1: i32, %arg2: i32) -> (i32, i32, i32, i32) {
    %c0_i32 = arith.constant 0 : i32
    %c0_i32_0 = arith.constant 0 : i32
    %c0_i32_1 = arith.constant 0 : i32
    return %arg0, %arg2, %c0_i32, %c0_i32_0 : i32, i32, i32, i32
  }
  func.func @transform_2(%arg0: i32, %arg1: i32, %arg2: i32) -> (i32, i32, i32, i32) {
    %c0_i32 = arith.constant 0 : i32
    %c0_i32_0 = arith.constant 0 : i32
    %c0_i32_1 = arith.constant 0 : i32
    return %arg0, %arg2, %c0_i32, %c0_i32_0 : i32, i32, i32, i32
  }
  func.func @transform_3(%arg0: i32, %arg1: i32, %arg2: i32) -> (i32, i32, i32) {
    %c0_i32 = arith.constant 0 : i32
    %c0_i32_0 = arith.constant 0 : i32
    return %arg0, %arg1, %c0_i32 : i32, i32, i32
  }
  func.func @transform_4(%arg0: i32, %arg1: i32, %arg2: i32) -> (i32, i32, i32) {
    %c0_i32 = arith.constant 0 : i32
    %c0_i32_0 = arith.constant 0 : i32
    %c0_i32_1 = arith.constant 0 : i32
    return %arg2, %c0_i32, %c0_i32_0 : i32, i32, i32
  }
  func.func @transform_5(%arg0: i32, %arg1: i32, %arg2: i32) -> (i32, i32) {
    %c0_i32 = arith.constant 0 : i32
    %c0_i32_0 = arith.constant 0 : i32
    %c0_i32_1 = arith.constant 0 : i32
    return %c0_i32, %c0_i32_0 : i32, i32
  }
  func.func @transform_6(%arg0: i32, %arg1: i32, %arg2: i32) -> (i32, i32, i32) {
    %c0_i32 = arith.constant 0 : i32
    %c0_i32_0 = arith.constant 0 : i32
    return %arg0, %arg1, %c0_i32 : i32, i32, i32
  }
}

module attributes {stable_mosaic.version = 11 : i64} {
  func.func @_mlp_kernel(%arg0: i32, %arg1: i32, %arg2: memref<16x32xf32, #tpu.memory_space<vmem>>, %arg3: memref<1x32xf32, #tpu.memory_space<vmem>>, %arg4: memref<1x32xf32, #tpu.memory_space<vmem>>, %arg5: memref<32x128xbf16, #tpu.memory_space<vmem>>, %arg6: memref<1x128xf32, #tpu.memory_space<vmem>>, %arg7: memref<128x32xbf16, #tpu.memory_space<vmem>>, %arg8: memref<1x32xf32, #tpu.memory_space<vmem>>, %arg9: memref<16x32xf32, #tpu.memory_space<vmem>>, %arg10: memref<16x32xbf16, #tpu.memory_space<vmem>>, %arg11: memref<16x32xf32, #tpu.memory_space<vmem>>) attributes {dimension_semantics = [#tpu.dimension_semantics<parallel>, #tpu.dimension_semantics<arbitrary>], iteration_bounds = array<i64: 1, 1>, scalar_prefetch = 0 : i64, scratch_operands = 2 : i64, tpu.core_type = #tpu.core_type<tc>, window_params = [{transform_indices = @transform_0, window_bounds = array<i64: 16, 32>}, {pipeline_mode = #tpu.pipeline_mode<synchronous>, transform_indices = @transform_1, window_bounds = array<i64: 1, 32>}, {pipeline_mode = #tpu.pipeline_mode<synchronous>, transform_indices = @transform_2, window_bounds = array<i64: 1, 32>}, {transform_indices = @transform_3, window_bounds = array<i64: 32, 128>}, {transform_indices = @transform_4, window_bounds = array<i64: 1, 128>}, {transform_indices = @transform_5, window_bounds = array<i64: 128, 32>}, {pipeline_mode = #tpu.pipeline_mode<synchronous>, transform_indices = @transform_6, window_bounds = array<i64: 1, 32>}, {transform_indices = @transform_7, window_bounds = array<i64: 16, 32>}]} {
    %c0_i32 = arith.constant 0 : i32
    %0 = arith.cmpi eq, %arg1, %c0_i32 : i32
    %1 = arith.extui %0 : i1 to i32
    %c0_i32_0 = arith.constant 0 : i32
    %2 = arith.cmpi ne, %1, %c0_i32_0 : i32
    scf.if %2 {
      %c0_17 = arith.constant 0 : index
      %c0_18 = arith.constant 0 : index
      %24 = vector.load %arg2[%c0_17, %c0_18] : memref<16x32xf32, #tpu.memory_space<vmem>>, vector<16x32xf32>
      %cst_19 = arith.constant dense<0.000000e+00> : vector<16xf32>
      %25 = vector.multi_reduction <add>, %24, %cst_19 [1] : vector<16x32xf32> to vector<16xf32>
      %26 = vector.shape_cast %25 : vector<16xf32> to vector<16x1xf32>
      %cst_20 = arith.constant 3.200000e+01 : f32
      %27 = vector.broadcast %cst_20 : f32 to vector<16x1xf32>
      %28 = arith.divf %26, %27 : vector<16x1xf32>
      %29 = vector.broadcast %28 : vector<16x1xf32> to vector<16x32xf32>
      %30 = arith.subf %24, %29 : vector<16x32xf32>
      %31 = arith.mulf %30, %30 : vector<16x32xf32>
      %cst_21 = arith.constant dense<0.000000e+00> : vector<16xf32>
      %32 = vector.multi_reduction <add>, %31, %cst_21 [1] : vector<16x32xf32> to vector<16xf32>
      %33 = vector.shape_cast %32 : vector<16xf32> to vector<16x1xf32>
      %cst_22 = arith.constant 3.200000e+01 : f32
      %34 = vector.broadcast %cst_22 : f32 to vector<16x1xf32>
      %35 = arith.divf %33, %34 : vector<16x1xf32>
      %cst_23 = arith.constant 9.99999974E-6 : f32
      %36 = vector.broadcast %cst_23 : f32 to vector<16x1xf32>
      %37 = arith.addf %35, %36 : vector<16x1xf32>
      %38 = math.rsqrt %37 : vector<16x1xf32>
      %39 = vector.broadcast %38 : vector<16x1xf32> to vector<16x32xf32>
      %40 = arith.mulf %30, %39 : vector<16x32xf32>
      %c0_24 = arith.constant 0 : index
      %c0_25 = arith.constant 0 : index
      %41 = vector.load %arg3[%c0_24, %c0_25] : memref<1x32xf32, #tpu.memory_space<vmem>>, vector<1x32xf32>
      %42 = vector.broadcast %41 : vector<1x32xf32> to vector<16x32xf32>
      %43 = arith.mulf %40, %42 : vector<16x32xf32>
      %c0_26 = arith.constant 0 : index
      %c0_27 = arith.constant 0 : index
      %44 = vector.load %arg4[%c0_26, %c0_27] : memref<1x32xf32, #tpu.memory_space<vmem>>, vector<1x32xf32>
      %45 = vector.broadcast %44 : vector<1x32xf32> to vector<16x32xf32>
      %46 = arith.addf %43, %45 : vector<16x32xf32>
      %47 = arith.truncf %46 : vector<16x32xf32> to vector<16x32xbf16>
      %c0_28 = arith.constant 0 : index
      %c0_29 = arith.constant 0 : index
      %48 = vector.load %arg10[%c0_28, %c0_29] : memref<16x32xbf16, #tpu.memory_space<vmem>>, vector<16x32xbf16>
      tpu.vector_store %arg10[%c0_28, %c0_29], %47 {strides = array<i32>} : memref<16x32xbf16, #tpu.memory_space<vmem>>, vector<16x32xbf16>,
      %c0_30 = arith.constant 0 : index
      %c0_31 = arith.constant 0 : index
      %49 = vector.load %arg8[%c0_30, %c0_31] : memref<1x32xf32, #tpu.memory_space<vmem>>, vector<1x32xf32>
      %50 = vector.broadcast %49 : vector<1x32xf32> to vector<16x32xf32>
      %51 = arith.addf %24, %50 : vector<16x32xf32>
      %c0_32 = arith.constant 0 : index
      %c0_33 = arith.constant 0 : index
      %52 = vector.load %arg11[%c0_32, %c0_33] : memref<16x32xf32, #tpu.memory_space<vmem>>, vector<16x32xf32>
      tpu.vector_store %arg11[%c0_32, %c0_33], %51 {strides = array<i32>} : memref<16x32xf32, #tpu.memory_space<vmem>>, vector<16x32xf32>,
    } else {
    }
    %c0 = arith.constant 0 : index
    %c0_1 = arith.constant 0 : index
    %3 = vector.load %arg10[%c0, %c0_1] : memref<16x32xbf16, #tpu.memory_space<vmem>>, vector<16x32xbf16>
    %c0_2 = arith.constant 0 : index
    %c0_3 = arith.constant 0 : index
    %4 = vector.load %arg5[%c0_2, %c0_3] : memref<32x128xbf16, #tpu.memory_space<vmem>>, vector<32x128xbf16>
    %cst = arith.constant dense<0.000000e+00> : vector<16x128xf32>
    %5 = tpu.matmul %3, %4, %cst {dimension_numbers = #tpu.dot_dimension_numbers<[1], [0], [0], [1], [0, 0, 1, 1], [], []>} : vector<16x32xbf16>, vector<32x128xbf16>, vector<16x128xf32> -> vector<16x128xf32>
    %c0_4 = arith.constant 0 : index
    %c0_5 = arith.constant 0 : index
    %6 = vector.load %arg6[%c0_4, %c0_5] : memref<1x128xf32, #tpu.memory_space<vmem>>, vector<1x128xf32>
    %7 = vector.broadcast %6 : vector<1x128xf32> to vector<16x128xf32>
    %8 = arith.addf %5, %7 : vector<16x128xf32>
    %cst_6 = arith.constant -1.702000e+00 : f32
    %9 = vector.broadcast %cst_6 : f32 to vector<16x128xf32>
    %10 = arith.mulf %9, %8 : vector<16x128xf32>
    %11 = math.exp %10 : vector<16x128xf32>
    %cst_7 = arith.constant 1.000000e+00 : f32
    %12 = vector.broadcast %cst_7 : f32 to vector<16x128xf32>
    %13 = arith.addf %12, %11 : vector<16x128xf32>
    %14 = arith.divf %8, %13 : vector<16x128xf32>
    %c0_8 = arith.constant 0 : index
    %c0_9 = arith.constant 0 : index
    %15 = vector.load %arg11[%c0_8, %c0_9] : memref<16x32xf32, #tpu.memory_space<vmem>>, vector<16x32xf32>
    %16 = arith.truncf %14 : vector<16x128xf32> to vector<16x128xbf16>
    %c0_10 = arith.constant 0 : index
    %c0_11 = arith.constant 0 : index
    %17 = vector.load %arg7[%c0_10, %c0_11] : memref<128x32xbf16, #tpu.memory_space<vmem>>, vector<128x32xbf16>
    %cst_12 = arith.constant dense<0.000000e+00> : vector<16x32xf32>
    %18 = tpu.matmul %16, %17, %cst_12 {dimension_numbers = #tpu.dot_dimension_numbers<[1], [0], [0], [1], [0, 0, 1, 1], [], []>} : vector<16x128xbf16>, vector<128x32xbf16>, vector<16x32xf32> -> vector<16x32xf32>
    %19 = arith.addf %15, %18 : vector<16x32xf32>
    %c0_13 = arith.constant 0 : index
    %c0_14 = arith.constant 0 : index
    %20 = vector.load %arg11[%c0_13, %c0_14] : memref<16x32xf32, #tpu.memory_space<vmem>>, vector<16x32xf32>
    tpu.vector_store %arg11[%c0_13, %c0_14], %19 {strides = array<i32>} : memref<16x32xf32, #tpu.memory_space<vmem>>, vector<16x32xf32>,
    %c0_i32_15 = arith.constant 0 : i32
    %21 = arith.cmpi eq, %arg1, %c0_i32_15 : i32
    %22 = arith.extui %21 : i1 to i32
    %c0_i32_16 = arith.constant 0 : i32
    %23 = arith.cmpi ne, %22, %c0_i32_16 : i32
    scf.if %23 {
      %c0_17 = arith.constant 0 : index
      %c0_18 = arith.constant 0 : index
      %24 = vector.load %arg11[%c0_17, %c0_18] : memref<16x32xf32, #tpu.memory_space<vmem>>, vector<16x32xf32>
      %c0_19 = arith.constant 0 : index
      %c0_20 = arith.constant 0 : index
      %25 = vector.load %arg9[%c0_19, %c0_20] : memref<16x32xf32, #tpu.memory_space<vmem>>, vector<16x32xf32>
      tpu.vector_store %arg9[%c0_19, %c0_20], %24 {strides = array<i32>} : memref<16x32xf32, #tpu.memory_space<vmem>>, vector<16x32xf32>,
    } else {
    }
    return
  }
  func.func @transform_0(%arg0: i32, %arg1: i32) -> (i32, i32) {
    %c0_i32 = arith.constant 0 : i32
    %c0_i32_0 = arith.constant 0 : i32
    return %arg0, %c0_i32 : i32, i32
  }
  func.func @transform_1(%arg0: i32, %arg1: i32) -> (i32, i32) {
    %c0_i32 = arith.constant 0 : i32
    %c0_i32_0 = arith.constant 0 : i32
    %c0_i32_1 = arith.constant 0 : i32
    return %c0_i32, %c0_i32_0 : i32, i32
  }
  func.func @transform_2(%arg0: i32, %arg1: i32) -> (i32, i32) {
    %c0_i32 = arith.constant 0 : i32
    %c0_i32_0 = arith.constant 0 : i32
    %c0_i32_1 = arith.constant 0 : i32
    return %c0_i32, %c0_i32_0 : i32, i32
  }
  func.func @transform_3(%arg0: i32, %arg1: i32) -> (i32, i32) {
    %c0_i32 = arith.constant 0 : i32
    %c0_i32_0 = arith.constant 0 : i32
    return %c0_i32, %arg1 : i32, i32
  }
  func.func @transform_4(%arg0: i32, %arg1: i32) -> (i32, i32) {
    %c0_i32 = arith.constant 0 : i32
    %c0_i32_0 = arith.constant 0 : i32
    return %c0_i32, %arg1 : i32, i32
  }
  func.func @transform_5(%arg0: i32, %arg1: i32) -> (i32, i32) {
    %c0_i32 = arith.constant 0 : i32
    %c0_i32_0 = arith.constant 0 : i32
    return %arg1, %c0_i32 : i32, i32
  }
  func.func @transform_6(%arg0: i32, %arg1: i32) -> (i32, i32) {
    %c0_i32 = arith.constant 0 : i32
    %c0_i32_0 = arith.constant 0 : i32
    %c0_i32_1 = arith.constant 0 : i32
    return %c0_i32, %c0_i32_0 : i32, i32
  }
  func.func @transform_7(%arg0: i32, %arg1: i32) -> (i32, i32) {
    %c0_i32 = arith.constant 0 : i32
    %c0_i32_0 = arith.constant 0 : i32
    return %arg0, %c0_i32 : i32, i32
  }
}

</mosaic_0001>

<llo_original>
// kernel: encoder_layer_forward.3
$region0: #{encoder_layer_forward.3}
  #allocation0 [shape = 'u32[]', space=smem, size = 0x4, offset = 0x4, fixed_abs, tag = 'smem constant byte address 0x4 - core index']
  #allocation1 [shape = 'u32[72,128]{1,0:T(1,128)}', space=vmem, size = 0x9000, scoped, tag = 'internal scratch']
  %s0 = inlined_call_operand.hbm [shape: f32[2,8,32], index: 0, kind: input, shape index: {}]
  %s1 = inlined_call_operand.vmem [shape: f32[1,32], index: 1, kind: input, shape index: {}]
  %s2 = inlined_call_operand.vmem [shape: f32[1,32], index: 2, kind: input, shape index: {}]
  %s3 = inlined_call_operand.hbm [shape: bf16[32,96], index: 3, kind: input, shape index: {}]
  %s4 = inlined_call_operand.vmem [shape: f32[1,96], index: 4, kind: input, shape index: {}]
  %s5 = inlined_call_operand.vmem [shape: bf16[2,4,8,8], index: 5, kind: output, shape index: {0}]
  %s6 = inlined_call_operand.vmem [shape: bf16[2,4,8,8], index: 6, kind: output, shape index: {1}]
  %s7 = inlined_call_operand.vmem [shape: bf16[2,4,8,8], index: 7, kind: output, shape index: {2}]
  %8 = xla_tuple %s5, %s6, %s7
  %s9 = sld [smem:[#allocation0]]
  $region77: #{encoder_layer_forward.3} parent=0
    _
  %s11 = ssub.s32 1, %s9
  %s12 = scalar_select 0, %s11, %s9
  $region1: #{encoder_layer_forward.3} parent=0
    #allocation2 [shape = 'u8[8192]{0}', space=vmem, size = 0x2000, scoped, tag = 'input window, operand 0']
    #allocation3 [shape = 's32[2]{0}', space=sflag, size = 0x8, scoped, tag = 'scoped memory for encoder_layer_forward.3']
    #allocation4 [shape = 'u8[8192]{0}', space=vmem, size = 0x2000, scoped, tag = 'input window, operand 3, single buffered']
    #allocation5 [shape = 's32[1]{0}', space=sflag, size = 0x4, scoped, tag = 'scoped memory for encoder_layer_forward.3']
    %13 = vsyncpa [#allocation3], 0
    %s14 = scalar_lea.sflag [#allocation3], 1
    %15 = vsyncpa %s14, 0
    %16 = vsyncpa [#allocation5], 0
    loop: start=0, step=1, limit=4
    $region2: #{encoder_layer_forward.3} parent=1 // loop_pre_header
      _
    $region3: #{encoder_layer_forward.3} parent=1 // loop_header
      %s18 = sphi 0, %s22
      %p19 = scmp.ge.s32.totalorder %s18, 4
      %s25 = sphi 0, %s37
      %s26 = sphi 0, %s33
      %s27 = sphi 0, %s25
      %s28 = sphi 0, %s26
      %s29 = sphi 0, %s27
      %s30 = sphi 0, %s28
      %s42 = sphi 0, %s44
      %s45 = sphi 0, %s42
      %s46 = sphi 0, %s45
      %s62 = sphi 0, %s46
      %s66 = sphi 0, %s66
      %s68 = sphi 0, %s66
      %s69 = sphi 0, %s68
      %s83 = sphi 0, %s69
      %s87 = sphi 0, %s87
      %s89 = sphi 0, %s87
      %s90 = sphi 0, %s89
      %s104 = sphi 0, %s90
      %s108 = sphi 0, %s108
      %s110 = sphi 0, %s108
      %s111 = sphi 0, %s110
      %s125 = sphi 0, %s111
      %s129 = sphi 0, %s129
      %s131 = sphi 0, %s129
      %s132 = sphi 0, %s131
      %s146 = sphi 0, %s132
      %s154 = sphi 0, %s156
      %s157 = sphi 0, %s154
      %s158 = sphi 0, %s157
      %s174 = sphi 0, %s158
      %s182 = sphi 0, %s184
      %s185 = sphi 0, %s182
      %s186 = sphi 0, %s185
      %s202 = sphi 0, %s186
      %s210 = sphi 0, %s212
      %s213 = sphi 0, %s210
      %s214 = sphi 0, %s213
      %s230 = sphi 0, %s214
    $region4: #{encoder_layer_forward.3} parent=1 // loop_header_branch
      %21 = sbr.rel (%p19) target = $region8
    $region5: #{encoder_layer_forward.3} parent=1 // loop_body
      %s23 = ssub.s32 %s18, 1
      %s24 = ssub.s32 %s18, 2
      %s31 = sadd.s32 1, %s26
      %p32 = scmp.ge.s32.totalorder %s31, 1
      %s33 = scalar_select %p32, 0, %s31
      %s34 = sadd.s32 1, %s25
      %s35 = scalar_select %p32, %s34, %s25
      %p36 = scmp.ge.s32.totalorder %s35, 2
      %s37 = scalar_select %p36, 0, %s35
      %s38 = ssub.s32 %s25, %s37
      %s39 = ssub.s32 %s26, %s33
      %s40 = sor.u32 %s38, %s39
      %p41 = scmp.eq.s32.totalorder %s40, 0
      %s43 = sadd.s32 %s42, 1
      %s44 = scalar_select %p41, %s42, %s43
      %p47 = pneg %p41
      %p48 = scmp.eq.s32.totalorder %s18, 1
      %p49 = por %p47, %p48
      %p50 = scmp.ne.s32.totalorder %s42, %s45
      %p51 = scmp.eq.s32.totalorder %s18, 0
      %p52 = por %p50, %p51
      %p53 = scmp.ne.s32.totalorder %s42, %s45
      %p54 = scmp.eq.s32.totalorder %s23, 1
      %p55 = por %p53, %p54
      %p56 = scmp.ne.s32.totalorder %s45, %s46
      %p57 = scmp.eq.s32.totalorder %s23, 0
      %p58 = por %p56, %p57
      %p59 = scmp.ne.s32.totalorder %s45, %s46
      %p60 = scmp.eq.s32.totalorder %s24, 1
      %p61 = por %p59, %p60
      %p63 = scmp.ne.s32.totalorder %s46, %s62
      %p64 = scmp.eq.s32.totalorder %s24, 0
      %p65 = por %p63, %p64
      %s67 = sadd.s32 %s66, 1
      %p70 = scmp.eq.s32.totalorder %s18, 1
      %p71 = scmp.ne.s32.totalorder %s66, %s68
      %p72 = scmp.eq.s32.totalorder %s18, 0
      %p73 = por %p71, %p72
      %p74 = scmp.ne.s32.totalorder %s66, %s68
      %p75 = scmp.eq.s32.totalorder %s23, 1
      %p76 = por %p74, %p75
      %p77 = scmp.ne.s32.totalorder %s68, %s69
      %p78 = scmp.eq.s32.totalorder %s23, 0
      %p79 = por %p77, %p78
      %p80 = scmp.ne.s32.totalorder %s68, %s69
      %p81 = scmp.eq.s32.totalorder %s24, 1
      %p82 = por %p80, %p81
      %p84 = scmp.ne.s32.totalorder %s69, %s83
      %p85 = scmp.eq.s32.totalorder %s24, 0
      %p86 = por %p84, %p85
      %s88 = sadd.s32 %s87, 1
      %p91 = scmp.eq.s32.totalorder %s18, 1
      %p92 = scmp.ne.s32.totalorder %s87, %s89
      %p93 = scmp.eq.s32.totalorder %s18, 0
      %p94 = por %p92, %p93
      %p95 = scmp.ne.s32.totalorder %s87, %s89
      %p96 = scmp.eq.s32.totalorder %s23, 1
      %p97 = por %p95, %p96
      %p98 = scmp.ne.s32.totalorder %s89, %s90
      %p99 = scmp.eq.s32.totalorder %s23, 0
      %p100 = por %p98, %p99
      %p101 = scmp.ne.s32.totalorder %s89, %s90
      %p102 = scmp.eq.s32.totalorder %s24, 1
      %p103 = por %p101, %p102
      %p105 = scmp.ne.s32.totalorder %s90, %s104
      %p106 = scmp.eq.s32.totalorder %s24, 0
      %p107 = por %p105, %p106
      %s109 = sadd.s32 %s108, 1
      %p112 = scmp.eq.s32.totalorder %s18, 1
      %p113 = scmp.ne.s32.totalorder %s108, %s110
      %p114 = scmp.eq.s32.totalorder %s18, 0
      %p115 = por %p113, %p114
      %p116 = scmp.ne.s32.totalorder %s108, %s110
      %p117 = scmp.eq.s32.totalorder %s23, 1
      %p118 = por %p116, %p117
      %p119 = scmp.ne.s32.totalorder %s110, %s111
      %p120 = scmp.eq.s32.totalorder %s23, 0
      %p121 = por %p119, %p120
      %p122 = scmp.ne.s32.totalorder %s110, %s111
      %p123 = scmp.eq.s32.totalorder %s24, 1
      %p124 = por %p122, %p123
      %p126 = scmp.ne.s32.totalorder %s111, %s125
      %p127 = scmp.eq.s32.totalorder %s24, 0
      %p128 = por %p126, %p127
      %s130 = sadd.s32 %s129, 1
      %p133 = scmp.eq.s32.totalorder %s18, 1
      %p134 = scmp.ne.s32.totalorder %s129, %s131
      %p135 = scmp.eq.s32.totalorder %s18, 0
      %p136 = por %p134, %p135
      %p137 = scmp.ne.s32.totalorder %s129, %s131
      %p138 = scmp.eq.s32.totalorder %s23, 1
      %p139 = por %p137, %p138
      %p140 = scmp.ne.s32.totalorder %s131, %s132
      %p141 = scmp.eq.s32.totalorder %s23, 0
      %p142 = por %p140, %p141
      %p143 = scmp.ne.s32.totalorder %s131, %s132
      %p144 = scmp.eq.s32.totalorder %s24, 1
      %p145 = por %p143, %p144
      %p147 = scmp.ne.s32.totalorder %s132, %s146
      %p148 = scmp.eq.s32.totalorder %s24, 0
      %p149 = por %p147, %p148
      %s150 = ssub.s32 %s25, %s37
      %s151 = ssub.s32 %s26, %s33
      %s152 = sor.u32 %s150, %s151
      %p153 = scmp.eq.s32.totalorder %s152, 0
      %s155 = sadd.s32 %s154, 1
      %s156 = scalar_select %p153, %s154, %s155
      %p159 = pneg %p153
      %p160 = scmp.eq.s32.totalorder %s18, 1
      %p161 = por %p159, %p160
      %p162 = scmp.ne.s32.totalorder %s154, %s157
      %p163 = scmp.eq.s32.totalorder %s18, 0
      %p164 = por %p162, %p163
      %p165 = scmp.ne.s32.totalorder %s154, %s157
      %p166 = scmp.eq.s32.totalorder %s23, 1
      %p167 = por %p165, %p166
      %p168 = scmp.ne.s32.totalorder %s157, %s158
      %p169 = scmp.eq.s32.totalorder %s23, 0
      %p170 = por %p168, %p169
      %p171 = scmp.ne.s32.totalorder %s157, %s158
      %p172 = scmp.eq.s32.totalorder %s24, 1
      %p173 = por %p171, %p172
      %p175 = scmp.ne.s32.totalorder %s158, %s174
      %p176 = scmp.eq.s32.totalorder %s24, 0
      %p177 = por %p175, %p176
      %s178 = ssub.s32 %s25, %s37
      %s179 = ssub.s32 %s26, %s33
      %s180 = sor.u32 %s178, %s179
      %p181 = scmp.eq.s32.totalorder %s180, 0
      %s183 = sadd.s32 %s182, 1
      %s184 = scalar_select %p181, %s182, %s183
      %p187 = pneg %p181
      %p188 = scmp.eq.s32.totalorder %s18, 1
      %p189 = por %p187, %p188
      %p190 = scmp.ne.s32.totalorder %s182, %s185
      %p191 = scmp.eq.s32.totalorder %s18, 0
      %p192 = por %p190, %p191
      %p193 = scmp.ne.s32.totalorder %s182, %s185
      %p194 = scmp.eq.s32.totalorder %s23, 1
      %p195 = por %p193, %p194
      %p196 = scmp.ne.s32.totalorder %s185, %s186
      %p197 = scmp.eq.s32.totalorder %s23, 0
      %p198 = por %p196, %p197
      %p199 = scmp.ne.s32.totalorder %s185, %s186
      %p200 = scmp.eq.s32.totalorder %s24, 1
      %p201 = por %p199, %p200
      %p203 = scmp.ne.s32.totalorder %s186, %s202
      %p204 = scmp.eq.s32.totalorder %s24, 0
      %p205 = por %p203, %p204
      %s206 = ssub.s32 %s25, %s37
      %s207 = ssub.s32 %s26, %s33
      %s208 = sor.u32 %s206, %s207
      %p209 = scmp.eq.s32.totalorder %s208, 0
      %s211 = sadd.s32 %s210, 1
      %s212 = scalar_select %p209, %s210, %s211
      %p215 = pneg %p209
      %p216 = scmp.eq.s32.totalorder %s18, 1
      %p217 = por %p215, %p216
      %p218 = scmp.ne.s32.totalorder %s210, %s213
      %p219 = scmp.eq.s32.totalorder %s18, 0
      %p220 = por %p218, %p219
      %p221 = scmp.ne.s32.totalorder %s210, %s213
      %p222 = scmp.eq.s32.totalorder %s23, 1
      %p223 = por %p221, %p222
      %p224 = scmp.ne.s32.totalorder %s213, %s214
      %p225 = scmp.eq.s32.totalorder %s23, 0
      %p226 = por %p224, %p225
      %p227 = scmp.ne.s32.totalorder %s213, %s214
      %p228 = scmp.eq.s32.totalorder %s24, 1
      %p229 = por %p227, %p228
      %p231 = scmp.ne.s32.totalorder %s214, %s230
      %p232 = scmp.eq.s32.totalorder %s24, 0
      %p233 = por %p231, %p232
      %p234 = scmp.le.s32.totalorder 1, %s18
      %p235 = scmp.lt.s32.totalorder %s18, 3
      %p236 = pnand %p234, %p235
      %p237 = pneg %p236
      // Predicated region
      $region9: #{encoder_layer_forward.3} parent=5 // pred_check
        _
      $region10: #{encoder_layer_forward.3} parent=5 // pred_check_branch
        %239 = sbr.rel (%p236) target = $region12
      $region11: #{encoder_layer_forward.3} parent=5 // pred_region
        %s240 = ssub.s32 %s18, 1
        // Predicated region
        $region13: #{encoder_layer_forward.3} parent=11 // pred_check
          %p241 = pneg %p79
        $region14: #{encoder_layer_forward.3} parent=11 // pred_check_branch
          %243 = sbr.rel (%p241) target = $region16
        $region15: #{encoder_layer_forward.3} parent=11 // pred_region
          _
        $region16: #{encoder_layer_forward.3} parent=11 // pred_fallthru
          _
        // Predicated region
        $region17: #{encoder_layer_forward.3} parent=11 // pred_check
          %p244 = pneg %p100
        $region18: #{encoder_layer_forward.3} parent=11 // pred_check_branch
          %246 = sbr.rel (%p244) target = $region20
        $region19: #{encoder_layer_forward.3} parent=11 // pred_region
          _
        $region20: #{encoder_layer_forward.3} parent=11 // pred_fallthru
          _
        // Predicated region
        $region21: #{encoder_layer_forward.3} parent=11 // pred_check
          %p247 = pneg %p121
        $region22: #{encoder_layer_forward.3} parent=11 // pred_check_branch
          %249 = sbr.rel (%p247) target = $region24
        $region23: #{encoder_layer_forward.3} parent=11 // pred_region
          %251 = vsyncadd [#allocation5], 0
          %s252 = sshll.u32 %s3, 4
          %s253 = int_to_ptr.hbm [resolvable:$true] %s252
          %s254 = sshll.u32 [#allocation4], 4
          %s255 = int_to_ptr.vmem [resolvable:$true] %s254
          %260 = dma.hbm_to_vmem [thread:$0]  %s253, 256, %s255, [#allocation5], 64, 64, 4
        $region24: #{encoder_layer_forward.3} parent=11 // pred_fallthru
          _
        // Predicated region
        $region25: #{encoder_layer_forward.3} parent=11 // pred_check
          %p261 = pneg %p142
        $region26: #{encoder_layer_forward.3} parent=11 // pred_check_branch
          %263 = sbr.rel (%p261) target = $region28
        $region27: #{encoder_layer_forward.3} parent=11 // pred_region
          _
        $region28: #{encoder_layer_forward.3} parent=11 // pred_fallthru
          _
      $region12: #{encoder_layer_forward.3} parent=5 // pred_fallthru
        _
      %p264 = scmp.lt.s32.totalorder %s18, 2
      // Predicated region
      $region29: #{encoder_layer_forward.3} parent=5 // pred_check
        %p265 = pneg %p264
      $region30: #{encoder_layer_forward.3} parent=5 // pred_check_branch
        %267 = sbr.rel (%p265) target = $region32
      $region31: #{encoder_layer_forward.3} parent=5 // pred_region
        // Predicated region
        $region33: #{encoder_layer_forward.3} parent=31 // pred_check
          %p268 = pneg %p52
        $region34: #{encoder_layer_forward.3} parent=31 // pred_check_branch
          %270 = sbr.rel (%p268) target = $region36
        $region35: #{encoder_layer_forward.3} parent=31 // pred_region
          %s271 = sand.u32 %s42, 1
          %s272 = scalar_lea.sflag [#allocation3], %s271
          %s273 = sand.u32 %s42, 1
          %s274 = smul.addr %s273, 8
          %s275 = scalar_lea.vmem [#allocation2], %s274
          %277 = vsyncadd %s272, 0
          %s278 = sadd.s32 %s26, %s25
          %s279 = smul.addr %s278, 8
          %s280 = scalar_lea.hbm %s0, %s279
          %s282 = sshll.u32 %s280, 4
          %s283 = int_to_ptr.hbm [resolvable:$true] %s282
          %s284 = sshll.u32 %s275, 4
          %s285 = int_to_ptr.vmem [resolvable:$true] %s284
          %287 = dma.hbm_to_vmem [thread:$0]  %s283, 128, %s285, %s272
        $region36: #{encoder_layer_forward.3} parent=31 // pred_fallthru
          _
      $region32: #{encoder_layer_forward.3} parent=5 // pred_fallthru
        _
      %p288 = scmp.le.s32.totalorder 1, %s18
      %p289 = scmp.lt.s32.totalorder %s18, 3
      %p290 = pnand %p288, %p289
      %p291 = pneg %p290
      // Predicated region
      $region37: #{encoder_layer_forward.3} parent=5 // pred_check
        _
      $region38: #{encoder_layer_forward.3} parent=5 // pred_check_branch
        %293 = sbr.rel (%p290) target = $region40
      $region39: #{encoder_layer_forward.3} parent=5 // pred_region
        %s294 = ssub.s32 %s18, 1
        %s295 = sand.u32 %s45, 1
        %s296 = scalar_lea.sflag [#allocation3], %s295
        %s297 = sand.u32 %s45, 1
        %s298 = smul.addr %s297, 8
        %s299 = scalar_lea.vmem [#allocation2], %s298
        // Predicated region
        $region41: #{encoder_layer_forward.3} parent=39 // pred_check
          %p300 = pneg %p58
        $region42: #{encoder_layer_forward.3} parent=39 // pred_check_branch
          %302 = sbr.rel (%p300) target = $region44
        $region43: #{encoder_layer_forward.3} parent=39 // pred_region
          %304 = dma.done %s296, 128
        $region44: #{encoder_layer_forward.3} parent=39 // pred_fallthru
          _
        // Predicated region
        $region45: #{encoder_layer_forward.3} parent=39 // pred_check
          %p305 = pneg %p121
        $region46: #{encoder_layer_forward.3} parent=39 // pred_check_branch
          %307 = sbr.rel (%p305) target = $region48
        $region47: #{encoder_layer_forward.3} parent=39 // pred_region
          %309 = dma.done [#allocation5], 256
        $region48: #{encoder_layer_forward.3} parent=39 // pred_fallthru
          _
        %s310 = sand.u32 %s45, 1
        %s311 = scalar_lea.sflag [#allocation3], %s310
        %s312 = sand.u32 %s45, 1
        %s313 = smul.addr %s312, 8
        %s314 = scalar_lea.vmem [#allocation2], %s313
        %p315 = pneg %p58
        %p316 = pneg %p55
        %p317 = pneg %p79
        %p318 = pneg %p76
        %p319 = pneg %p100
        %p320 = pneg %p97
        %p321 = pneg %p121
        %p322 = pneg %p118
        %p323 = pneg %p142
        %p324 = pneg %p139
        %p325 = pneg %p170
        %p326 = pneg %p167
        %p327 = scmp.lt.s32.totalorder %s27, 1
        %s328 = scalar_select %p327, %s27, 1
        %p329 = scmp.lt.s32.totalorder %s28, 0
        %s330 = scalar_select %p329, %s28, 0
        %s331 = smul.addr %s328, 4
        %s332 = sadd.s32 %s330, %s331
        %s333 = smul.addr %s332, 4
        %s334 = scalar_lea.vmem %s5, %s333
        %p335 = pneg %p198
        %p336 = pneg %p195
        %p337 = scmp.lt.s32.totalorder %s27, 1
        %s338 = scalar_select %p337, %s27, 1
        %p339 = scmp.lt.s32.totalorder %s28, 0
        %s340 = scalar_select %p339, %s28, 0
        %s341 = smul.addr %s338, 4
        %s342 = sadd.s32 %s340, %s341
        %s343 = smul.addr %s342, 4
        %s344 = scalar_lea.vmem %s6, %s343
        %p345 = pneg %p226
        %p346 = pneg %p223
        %p347 = scmp.lt.s32.totalorder %s27, 1
        %s348 = scalar_select %p347, %s27, 1
        %p349 = scmp.lt.s32.totalorder %s28, 0
        %s350 = scalar_select %p349, %s28, 0
        %s351 = smul.addr %s348, 4
        %s352 = sadd.s32 %s350, %s351
        %s353 = smul.addr %s352, 4
        %s354 = scalar_lea.vmem %s7, %s353
        %p355 = scmp.lt.s32.totalorder %s27, 1
        %s356 = scalar_select %p355, %s27, 1
        %p357 = scmp.lt.s32.totalorder %s28, 0
        %s358 = scalar_select %p357, %s28, 0
        %s359 = smul.addr %s356, 4
        %s360 = sadd.s32 %s358, %s359
        %s361 = smul.addr %s360, 4
        %s362 = scalar_lea.vmem %s5, %s361
        %p363 = scmp.lt.s32.totalorder %s27, 1
        %s364 = scalar_select %p363, %s27, 1
        %p365 = scmp.lt.s32.totalorder %s28, 0
        %s366 = scalar_select %p365, %s28, 0
        %s367 = smul.addr %s364, 4
        %s368 = sadd.s32 %s366, %s367
        %s369 = smul.addr %s368, 4
        %s370 = scalar_lea.vmem %s6, %s369
        %p371 = scmp.lt.s32.totalorder %s27, 1
        %s372 = scalar_select %p371, %s27, 1
        %p373 = scmp.lt.s32.totalorder %s28, 0
        %s374 = scalar_select %p373, %s28, 0
        %s375 = smul.addr %s372, 4
        %s376 = sadd.s32 %s374, %s375
        %s377 = smul.addr %s376, 4
        %s378 = scalar_lea.vmem %s7, %s377
        %v380 = vld [vmem:[%s299] sm:$0xff]
        %vm381 = vcmask 261120
        %v382 = vsel %vm381, %v380, 0.0
        %383 = vadd.xlane.f32.xlu0 %v382
        %v384 = vpop.xlane.xlu0 %383
        %v385 = vrcp.pop 32.0
        %v386 = vmul.f32 32.0, %v385
        %v387 = vsub.f32 1.0, %v386
        %v388 = vmul.f32 %v385, %v387
        %v389 = vadd.f32 %v385, %v388
        %vm390 = vweird.f32 %v385
        %v391 = vsel %vm390, %v385, %v389
        %v392 = vmul.f32 %v384, %v391
        %v393 = vsub.f32 %v380, %v392
        %v394 = vmul.f32 %v393, %v393
        %v395 = vsel %vm381, %v394, 0.0
        %396 = vadd.xlane.f32.xlu0 %v395
        %v397 = vpop.xlane.xlu0 %396
        %v398 = vmul.f32 %v397, %v391
        %v399 = vadd.f32 %v398, 1e-05
        %v400 = vrsqrt.pop %v399
        %v401 = vmul.f32 %v400, %v399
        %v402 = vmul.f32 %v401, %v400
        %v403 = vmul.f32 0.5, %v402
        %v404 = vsub.f32 1.5, %v403
        %v405 = vmul.f32 %v400, %v404
        %vm406 = vweird.f32 %v399
        %vm407 = vweird.f32 %v400
        %vm408 = vmor %vm406, %vm407
        %v409 = vsel %vm408, %v400, %v405
        %v410 = vmul.f32 %v393, %v409
        %v411 = vld [vmem:[%s1] sm:$0x1]
        %v413 = vperm.slane %v411, 0
        %v415 = vmul.f32 %v410, %v413
        %v416 = vld [vmem:[%s2] sm:$0x1]
        %v418 = vperm.slane %v416, 0
        %v420 = vadd.f32 %v415, %v418
        %v421 = vpack.c.bf16 %v420, %v420
        %v422 = vld [vmem:[#allocation4] sm:$0xf]
        %v423 = vld [vmem:[#allocation4 + $0x4] sm:$0xf]
        %v424 = vld [vmem:[#allocation4 + $0x8] sm:$0xf]
        %v425 = vld [vmem:[#allocation4 + $0xc] sm:$0xf]
        %v426 = vld [vmem:[%s4] sm:$0x1]
        %v428 = vperm.slane %v426, 0
        %v434 = vunpack.c.l.b16 %v422
        %v435 = vunpack.c.l.b16 %v423
        %v436 = vunpack.c.l.b16 %v424
        %v437 = vunpack.c.l.b16 %v425
        %v438 = vpack.c.b16 %v435, %v434
        %v439 = vpack.c.b16 %v437, %v436
        %v443 = vsel %vm381, %v421, 0
        %445 = vmatpush.bf16.msra.mxu0 0
        %446 = vmatpush.bf16.msra.mxu0 0
        %447 = vmatpush.bf16.msra.mxu0 0
        %448 = vmatpush.bf16.msra.mxu0 0
        %449 = vmatpush.bf16.msra.mxu0 0
        %450 = vmatpush.bf16.msra.mxu0 0
        %451 = vmatpush.bf16.msra.mxu0 %v439
        %452 = vmatpush.bf16.msra.mxu0 %v438
        %453 = vmatmul.bf16.gmra.mxu0 %v443
        %v454 = vpop.f32.mrf.mxu0
        %v455 = vadd.f32 %v428, %v454
        %v456 = vpop.f32.mrf.mxu0
        %457 = vdwg.mxu0
        %v458 = vpack.c.bf16 %v455, %v455
        %vm459 = vcmask 60416
        %460 = vst.msk [vmem:[%s362] sm:$0xf] %vm459, %v458
        %462 = vrot.lane.b32.xlu0 %v458, 96
        %v463 = vpop.permute.xlu0 %462
        %465 = vst.msk [vmem:[%s370] sm:$0xf] %vm459, %v463
        %466 = vrot.lane.b32.xlu0 %v458, 64
        %v467 = vpop.permute.xlu0 %466
        %469 = vst.msk [vmem:[%s378] sm:$0xf] %vm459, %v467
        %470 = vrot.lane.b32.xlu0 %v458, 120
        %v471 = vpop.permute.xlu0 %470
        %s473 = scalar_lea.vmem %s362, 4
        %474 = vst.msk [vmem:[%s473] sm:$0xf] %vm459, %v471
        %475 = vrot.lane.b32.xlu0 %v458, 88
        %v476 = vpop.permute.xlu0 %475
        %s478 = scalar_lea.vmem %s370, 4
        %479 = vst.msk [vmem:[%s478] sm:$0xf] %vm459, %v476
        %480 = vrot.lane.b32.xlu0 %v458, 56
        %v481 = vpop.permute.xlu0 %480
        %s483 = scalar_lea.vmem %s378, 4
        %484 = vst.msk [vmem:[%s483] sm:$0xf] %vm459, %v481
        %485 = vrot.lane.b32.xlu0 %v458, 112
        %v486 = vpop.permute.xlu0 %485
        %s488 = scalar_lea.vmem %s362, 8
        %489 = vst.msk [vmem:[%s488] sm:$0xf] %vm459, %v486
        %490 = vrot.lane.b32.xlu0 %v458, 80
        %v491 = vpop.permute.xlu0 %490
        %s493 = scalar_lea.vmem %s370, 8
        %494 = vst.msk [vmem:[%s493] sm:$0xf] %vm459, %v491
        %495 = vrot.lane.b32.xlu0 %v458, 48
        %v496 = vpop.permute.xlu0 %495
        %s498 = scalar_lea.vmem %s378, 8
        %499 = vst.msk [vmem:[%s498] sm:$0xf] %vm459, %v496
        %500 = vrot.lane.b32.xlu0 %v458, 104
        %v501 = vpop.permute.xlu0 %500
        %s503 = scalar_lea.vmem %s362, 12
        %504 = vst.msk [vmem:[%s503] sm:$0xf] %vm459, %v501
        %505 = vrot.lane.b32.xlu0 %v458, 72
        %v506 = vpop.permute.xlu0 %505
        %s508 = scalar_lea.vmem %s370, 12
        %509 = vst.msk [vmem:[%s508] sm:$0xf] %vm459, %v506
        %510 = vrot.lane.b32.xlu0 %v458, 40
        %v511 = vpop.permute.xlu0 %510
        %s513 = scalar_lea.vmem %s378, 12
        %514 = vst.msk [vmem:[%s513] sm:$0xf] %vm459, %v511
        %p515 = scmp.lt.s32.totalorder %s27, 1
        %s516 = scalar_select %p515, %s27, 1
        %p517 = scmp.lt.s32.totalorder %s28, 0
        %s518 = scalar_select %p517, %s28, 0
        %s519 = smul.addr %s516, 4
        %s520 = sadd.s32 %s518, %s519
        %s521 = smul.addr %s520, 4
        %s522 = scalar_lea.vmem %s5, %s521
        %p523 = scmp.lt.s32.totalorder %s27, 1
        %s524 = scalar_select %p523, %s27, 1
        %p525 = scmp.lt.s32.totalorder %s28, 0
        %s526 = scalar_select %p525, %s28, 0
        %s527 = smul.addr %s524, 4
        %s528 = sadd.s32 %s526, %s527
        %s529 = smul.addr %s528, 4
        %s530 = scalar_lea.vmem %s6, %s529
        %p531 = scmp.lt.s32.totalorder %s27, 1
        %s532 = scalar_select %p531, %s27, 1
        %p533 = scmp.lt.s32.totalorder %s28, 0
        %s534 = scalar_select %p533, %s28, 0
        %s535 = smul.addr %s532, 4
        %s536 = sadd.s32 %s534, %s535
        %s537 = smul.addr %s536, 4
        %s538 = scalar_lea.vmem %s7, %s537
        // Predicated region
        $region49: #{encoder_layer_forward.3} parent=39 // pred_check
          %p539 = pneg %p167
        $region50: #{encoder_layer_forward.3} parent=39 // pred_check_branch
          %541 = sbr.rel (%p539) target = $region52
        $region51: #{encoder_layer_forward.3} parent=39 // pred_region
          _
        $region52: #{encoder_layer_forward.3} parent=39 // pred_fallthru
          _
        // Predicated region
        $region53: #{encoder_layer_forward.3} parent=39 // pred_check
          %p542 = pneg %p195
        $region54: #{encoder_layer_forward.3} parent=39 // pred_check_branch
          %544 = sbr.rel (%p542) target = $region56
        $region55: #{encoder_layer_forward.3} parent=39 // pred_region
          _
        $region56: #{encoder_layer_forward.3} parent=39 // pred_fallthru
          _
        // Predicated region
        $region57: #{encoder_layer_forward.3} parent=39 // pred_check
          %p545 = pneg %p223
        $region58: #{encoder_layer_forward.3} parent=39 // pred_check_branch
          %547 = sbr.rel (%p545) target = $region60
        $region59: #{encoder_layer_forward.3} parent=39 // pred_region
          _
        $region60: #{encoder_layer_forward.3} parent=39 // pred_fallthru
          _
      $region40: #{encoder_layer_forward.3} parent=5 // pred_fallthru
        _
      %p548 = scmp.le.s32.totalorder 2, %s18
      // Predicated region
      $region61: #{encoder_layer_forward.3} parent=5 // pred_check
        %p549 = pneg %p548
      $region62: #{encoder_layer_forward.3} parent=5 // pred_check_branch
        %551 = sbr.rel (%p549) target = $region64
      $region63: #{encoder_layer_forward.3} parent=5 // pred_region
        %s552 = ssub.s32 %s18, 2
        // Predicated region
        $region65: #{encoder_layer_forward.3} parent=63 // pred_check
          %p553 = pneg %p173
        $region66: #{encoder_layer_forward.3} parent=63 // pred_check_branch
          %555 = sbr.rel (%p553) target = $region68
        $region67: #{encoder_layer_forward.3} parent=63 // pred_region
          %p556 = scmp.lt.s32.totalorder %s29, 1
          %s557 = scalar_select %p556, %s29, 1
          %p558 = scmp.lt.s32.totalorder %s30, 0
          %s559 = scalar_select %p558, %s30, 0
          %s560 = smul.addr %s557, 4
          %s561 = sadd.s32 %s559, %s560
          %s562 = smul.addr %s561, 4
          %s563 = scalar_lea.vmem %s5, %s562
        $region68: #{encoder_layer_forward.3} parent=63 // pred_fallthru
          _
        // Predicated region
        $region69: #{encoder_layer_forward.3} parent=63 // pred_check
          %p564 = pneg %p201
        $region70: #{encoder_layer_forward.3} parent=63 // pred_check_branch
          %566 = sbr.rel (%p564) target = $region72
        $region71: #{encoder_layer_forward.3} parent=63 // pred_region
          %p567 = scmp.lt.s32.totalorder %s29, 1
          %s568 = scalar_select %p567, %s29, 1
          %p569 = scmp.lt.s32.totalorder %s30, 0
          %s570 = scalar_select %p569, %s30, 0
          %s571 = smul.addr %s568, 4
          %s572 = sadd.s32 %s570, %s571
          %s573 = smul.addr %s572, 4
          %s574 = scalar_lea.vmem %s6, %s573
        $region72: #{encoder_layer_forward.3} parent=63 // pred_fallthru
          _
        // Predicated region
        $region73: #{encoder_layer_forward.3} parent=63 // pred_check
          %p575 = pneg %p229
        $region74: #{encoder_layer_forward.3} parent=63 // pred_check_branch
          %577 = sbr.rel (%p575) target = $region76
        $region75: #{encoder_layer_forward.3} parent=63 // pred_region
          %p578 = scmp.lt.s32.totalorder %s29, 1
          %s579 = scalar_select %p578, %s29, 1
          %p580 = scmp.lt.s32.totalorder %s30, 0
          %s581 = scalar_select %p580, %s30, 0
          %s582 = smul.addr %s579, 4
          %s583 = sadd.s32 %s581, %s582
          %s584 = smul.addr %s583, 4
          %s585 = scalar_lea.vmem %s7, %s584
        $region76: #{encoder_layer_forward.3} parent=63 // pred_fallthru
          _
      $region64: #{encoder_layer_forward.3} parent=5 // pred_fallthru
        _
    $region6: #{encoder_layer_forward.3} parent=1 // loop_footer
      %s22 = sadd.s32 1, %s18
    $region7: #{encoder_layer_forward.3} parent=1 // loop_footer_branch
      %17 = sbr.rel target = $region3
    $region8: #{encoder_layer_forward.3} parent=1 // loop_exit
      _
    %586 = vsyncpa [#allocation3], 1
    %s587 = scalar_lea.sflag [#allocation3], 1
    %588 = vsyncpa %s587, 1
    %589 = vsyncpa [#allocation5], 1

// kernel: encoder_layer_forward.4
$region0: #{encoder_layer_forward.4}
  #allocation0 [shape = 'u32[]', space=smem, size = 0x4, offset = 0x4, fixed_abs, tag = 'smem constant byte address 0x4 - core index']
  #allocation1 [shape = 'u32[72,128]{1,0:T(1,128)}', space=vmem, size = 0x9000, scoped, tag = 'internal scratch']
  #allocation2 [shape = 'f32[8,32]{1,0:T(8,128)}', space=vmem, size = 0x1000, scoped, tag = 'scratch operand']
  %s0 = inlined_call_operand.vmem [shape: bf16[2,4,8,8], index: 0, kind: input, shape index: {}]
  %s1 = inlined_call_operand.vmem [shape: bf16[2,4,8,8], index: 1, kind: input, shape index: {}]
  %s2 = inlined_call_operand.vmem [shape: bf16[2,4,8,8], index: 2, kind: input, shape index: {}]
  %s3 = inlined_call_operand.hbm [shape: f32[2,8,32], index: 3, kind: input, shape index: {}]
  %s4 = inlined_call_operand.hbm [shape: bf16[4,8,32], index: 4, kind: input, shape index: {}]
  %s5 = inlined_call_operand.vmem [shape: f32[1,32], index: 5, kind: input, shape index: {}]
  %s6 = inlined_call_operand.vmem [shape: f32[2,8,32], index: 6, kind: output, shape index: {}]
  %s7 = sld [smem:[#allocation0]]
  $region73: #{encoder_layer_forward.4} parent=0
    _
  %s9 = ssub.s32 1, %s7
  %s10 = scalar_select 0, %s9, %s7
  $region1: #{encoder_layer_forward.4} parent=0
    #allocation3 [shape = 'u8[8192]{0}', space=vmem, size = 0x2000, scoped, tag = 'input window, operand 3']
    #allocation4 [shape = 's32[2]{0}', space=sflag, size = 0x8, scoped, tag = 'scoped memory for encoder_layer_forward.4']
    #allocation5 [shape = 'u8[4096]{0}', space=vmem, size = 0x1000, scoped, tag = 'input window, operand 4']
    #allocation6 [shape = 's32[2]{0}', space=sflag, size = 0x8, scoped, tag = 'scoped memory for encoder_layer_forward.4']
    %11 = vsyncpa [#allocation4], 0
    %s12 = scalar_lea.sflag [#allocation4], 1
    %13 = vsyncpa %s12, 0
    %14 = vsyncpa [#allocation6], 0
    %s15 = scalar_lea.sflag [#allocation6], 1
    %16 = vsyncpa %s15, 0
    loop: start=0, step=1, limit=10
    $region2: #{encoder_layer_forward.4} parent=1 // loop_pre_header
      _
    $region3: #{encoder_layer_forward.4} parent=1 // loop_header
      %s18 = sphi 0, %s22
      %p19 = scmp.ge.s32.totalorder %s18, 10
      %s25 = sphi 0, %s44
      %s26 = sphi 0, %s40
      %s27 = sphi 0, %s36
      %s28 = sphi 0, %s25
      %s29 = sphi 0, %s26
      %s30 = sphi 0, %s27
      %s31 = sphi 0, %s28
      %s32 = sphi 0, %s29
      %s33 = sphi 0, %s30
      %s51 = sphi 0, %s53
      %s54 = sphi 0, %s51
      %s55 = sphi 0, %s54
      %s71 = sphi 0, %s55
      %s79 = sphi 0, %s81
      %s82 = sphi 0, %s79
      %s83 = sphi 0, %s82
      %s99 = sphi 0, %s83
      %s107 = sphi 0, %s109
      %s110 = sphi 0, %s107
      %s111 = sphi 0, %s110
      %s127 = sphi 0, %s111
      %s135 = sphi 0, %s137
      %s138 = sphi 0, %s135
      %s139 = sphi 0, %s138
      %s155 = sphi 0, %s139
      %s161 = sphi 0, %s163
      %s164 = sphi 0, %s161
      %s165 = sphi 0, %s164
      %s181 = sphi 0, %s165
      %s185 = sphi 0, %s185
      %s187 = sphi 0, %s185
      %s188 = sphi 0, %s187
      %s202 = sphi 0, %s188
      %s210 = sphi 0, %s212
      %s213 = sphi 0, %s210
      %s214 = sphi 0, %s213
      %s230 = sphi 0, %s214
    $region4: #{encoder_layer_forward.4} parent=1 // loop_header_branch
      %21 = sbr.rel (%p19) target = $region8
    $region5: #{encoder_layer_forward.4} parent=1 // loop_body
      %s23 = ssub.s32 %s18, 1
      %s24 = ssub.s32 %s18, 2
      %s34 = sadd.s32 1, %s27
      %p35 = scmp.ge.s32.totalorder %s34, 4
      %s36 = scalar_select %p35, 0, %s34
      %s37 = sadd.s32 1, %s26
      %s38 = scalar_select %p35, %s37, %s26
      %p39 = scmp.ge.s32.totalorder %s38, 1
      %s40 = scalar_select %p39, 0, %s38
      %s41 = sadd.s32 1, %s25
      %s42 = scalar_select %p39, %s41, %s25
      %p43 = scmp.ge.s32.totalorder %s42, 2
      %s44 = scalar_select %p43, 0, %s42
      %s45 = ssub.s32 %s25, %s44
      %s46 = ssub.s32 %s27, %s36
      %s47 = sor.u32 %s45, %s46
      %s48 = ssub.s32 %s26, %s40
      %s49 = sor.u32 %s47, %s48
      %p50 = scmp.eq.s32.totalorder %s49, 0
      %s52 = sadd.s32 %s51, 1
      %s53 = scalar_select %p50, %s51, %s52
      %p56 = pneg %p50
      %p57 = scmp.eq.s32.totalorder %s18, 7
      %p58 = por %p56, %p57
      %p59 = scmp.ne.s32.totalorder %s51, %s54
      %p60 = scmp.eq.s32.totalorder %s18, 0
      %p61 = por %p59, %p60
      %p62 = scmp.ne.s32.totalorder %s51, %s54
      %p63 = scmp.eq.s32.totalorder %s23, 7
      %p64 = por %p62, %p63
      %p65 = scmp.ne.s32.totalorder %s54, %s55
      %p66 = scmp.eq.s32.totalorder %s23, 0
      %p67 = por %p65, %p66
      %p68 = scmp.ne.s32.totalorder %s54, %s55
      %p69 = scmp.eq.s32.totalorder %s24, 7
      %p70 = por %p68, %p69
      %p72 = scmp.ne.s32.totalorder %s55, %s71
      %p73 = scmp.eq.s32.totalorder %s24, 0
      %p74 = por %p72, %p73
      %s75 = ssub.s32 %s25, %s44
      %s76 = ssub.s32 %s27, %s36
      %s77 = sor.u32 %s75, %s76
      %p78 = scmp.eq.s32.totalorder %s77, 0
      %s80 = sadd.s32 %s79, 1
      %s81 = scalar_select %p78, %s79, %s80
      %p84 = pneg %p78
      %p85 = scmp.eq.s32.totalorder %s18, 7
      %p86 = por %p84, %p85
      %p87 = scmp.ne.s32.totalorder %s79, %s82
      %p88 = scmp.eq.s32.totalorder %s18, 0
      %p89 = por %p87, %p88
      %p90 = scmp.ne.s32.totalorder %s79, %s82
      %p91 = scmp.eq.s32.totalorder %s23, 7
      %p92 = por %p90, %p91
      %p93 = scmp.ne.s32.totalorder %s82, %s83
      %p94 = scmp.eq.s32.totalorder %s23, 0
      %p95 = por %p93, %p94
      %p96 = scmp.ne.s32.totalorder %s82, %s83
      %p97 = scmp.eq.s32.totalorder %s24, 7
      %p98 = por %p96, %p97
      %p100 = scmp.ne.s32.totalorder %s83, %s99
      %p101 = scmp.eq.s32.totalorder %s24, 0
      %p102 = por %p100, %p101
      %s103 = ssub.s32 %s25, %s44
      %s104 = ssub.s32 %s27, %s36
      %s105 = sor.u32 %s103, %s104
      %p106 = scmp.eq.s32.totalorder %s105, 0
      %s108 = sadd.s32 %s107, 1
      %s109 = scalar_select %p106, %s107, %s108
      %p112 = pneg %p106
      %p113 = scmp.eq.s32.totalorder %s18, 7
      %p114 = por %p112, %p113
      %p115 = scmp.ne.s32.totalorder %s107, %s110
      %p116 = scmp.eq.s32.totalorder %s18, 0
      %p117 = por %p115, %p116
      %p118 = scmp.ne.s32.totalorder %s107, %s110
      %p119 = scmp.eq.s32.totalorder %s23, 7
      %p120 = por %p118, %p119
      %p121 = scmp.ne.s32.totalorder %s110, %s111
      %p122 = scmp.eq.s32.totalorder %s23, 0
      %p123 = por %p121, %p122
      %p124 = scmp.ne.s32.totalorder %s110, %s111
      %p125 = scmp.eq.s32.totalorder %s24, 7
      %p126 = por %p124, %p125
      %p128 = scmp.ne.s32.totalorder %s111, %s127
      %p129 = scmp.eq.s32.totalorder %s24, 0
      %p130 = por %p128, %p129
      %s131 = ssub.s32 %s25, %s44
      %s132 = ssub.s32 %s26, %s40
      %s133 = sor.u32 %s131, %s132
      %p134 = scmp.eq.s32.totalorder %s133, 0
      %s136 = sadd.s32 %s135, 1
      %s137 = scalar_select %p134, %s135, %s136
      %p140 = pneg %p134
      %p141 = scmp.eq.s32.totalorder %s18, 7
      %p142 = por %p140, %p141
      %p143 = scmp.ne.s32.totalorder %s135, %s138
      %p144 = scmp.eq.s32.totalorder %s18, 0
      %p145 = por %p143, %p144
      %p146 = scmp.ne.s32.totalorder %s135, %s138
      %p147 = scmp.eq.s32.totalorder %s23, 7
      %p148 = por %p146, %p147
      %p149 = scmp.ne.s32.totalorder %s138, %s139
      %p150 = scmp.eq.s32.totalorder %s23, 0
      %p151 = por %p149, %p150
      %p152 = scmp.ne.s32.totalorder %s138, %s139
      %p153 = scmp.eq.s32.totalorder %s24, 7
      %p154 = por %p152, %p153
      %p156 = scmp.ne.s32.totalorder %s139, %s155
      %p157 = scmp.eq.s32.totalorder %s24, 0
      %p158 = por %p156, %p157
      %s159 = ssub.s32 %s27, %s36
      %p160 = scmp.eq.s32.totalorder %s159, 0
      %s162 = sadd.s32 %s161, 1
      %s163 = scalar_select %p160, %s161, %s162
      %p166 = pneg %p160
      %p167 = scmp.eq.s32.totalorder %s18, 7
      %p168 = por %p166, %p167
      %p169 = scmp.ne.s32.totalorder %s161, %s164
      %p170 = scmp.eq.s32.totalorder %s18, 0
      %p171 = por %p169, %p170
      %p172 = scmp.ne.s32.totalorder %s161, %s164
      %p173 = scmp.eq.s32.totalorder %s23, 7
      %p174 = por %p172, %p173
      %p175 = scmp.ne.s32.totalorder %s164, %s165
      %p176 = scmp.eq.s32.totalorder %s23, 0
      %p177 = por %p175, %p176
      %p178 = scmp.ne.s32.totalorder %s164, %s165
      %p179 = scmp.eq.s32.totalorder %s24, 7
      %p180 = por %p178, %p179
      %p182 = scmp.ne.s32.totalorder %s165, %s181
      %p183 = scmp.eq.s32.totalorder %s24, 0
      %p184 = por %p182, %p183
      %s186 = sadd.s32 %s185, 1
      %p189 = scmp.eq.s32.totalorder %s18, 7
      %p190 = scmp.ne.s32.totalorder %s185, %s187
      %p191 = scmp.eq.s32.totalorder %s18, 0
      %p192 = por %p190, %p191
      %p193 = scmp.ne.s32.totalorder %s185, %s187
      %p194 = scmp.eq.s32.totalorder %s23, 7
      %p195 = por %p193, %p194
      %p196 = scmp.ne.s32.totalorder %s187, %s188
      %p197 = scmp.eq.s32.totalorder %s23, 0
      %p198 = por %p196, %p197
      %p199 = scmp.ne.s32.totalorder %s187, %s188
      %p200 = scmp.eq.s32.totalorder %s24, 7
      %p201 = por %p199, %p200
      %p203 = scmp.ne.s32.totalorder %s188, %s202
      %p204 = scmp.eq.s32.totalorder %s24, 0
      %p205 = por %p203, %p204
      %s206 = ssub.s32 %s25, %s44
      %s207 = ssub.s32 %s26, %s40
      %s208 = sor.u32 %s206, %s207
      %p209 = scmp.eq.s32.totalorder %s208, 0
      %s211 = sadd.s32 %s210, 1
      %s212 = scalar_select %p209, %s210, %s211
      %p215 = pneg %p209
      %p216 = scmp.eq.s32.totalorder %s18, 7
      %p217 = por %p215, %p216
      %p218 = scmp.ne.s32.totalorder %s210, %s213
      %p219 = scmp.eq.s32.totalorder %s18, 0
      %p220 = por %p218, %p219
      %p221 = scmp.ne.s32.totalorder %s210, %s213
      %p222 = scmp.eq.s32.totalorder %s23, 7
      %p223 = por %p221, %p222
      %p224 = scmp.ne.s32.totalorder %s213, %s214
      %p225 = scmp.eq.s32.totalorder %s23, 0
      %p226 = por %p224, %p225
      %p227 = scmp.ne.s32.totalorder %s213, %s214
      %p228 = scmp.eq.s32.totalorder %s24, 7
      %p229 = por %p227, %p228
      %p231 = scmp.ne.s32.totalorder %s214, %s230
      %p232 = scmp.eq.s32.totalorder %s24, 0
      %p233 = por %p231, %p232
      %p234 = scmp.le.s32.totalorder 1, %s18
      %p235 = scmp.lt.s32.totalorder %s18, 9
      %p236 = pnand %p234, %p235
      %p237 = pneg %p236
      // Predicated region
      $region9: #{encoder_layer_forward.4} parent=5 // pred_check
        _
      $region10: #{encoder_layer_forward.4} parent=5 // pred_check_branch
        %239 = sbr.rel (%p236) target = $region12
      $region11: #{encoder_layer_forward.4} parent=5 // pred_region
        %s240 = ssub.s32 %s18, 1
        // Predicated region
        $region13: #{encoder_layer_forward.4} parent=11 // pred_check
          %p241 = pneg %p198
        $region14: #{encoder_layer_forward.4} parent=11 // pred_check_branch
          %243 = sbr.rel (%p241) target = $region16
        $region15: #{encoder_layer_forward.4} parent=11 // pred_region
          _
        $region16: #{encoder_layer_forward.4} parent=11 // pred_fallthru
          _
      $region12: #{encoder_layer_forward.4} parent=5 // pred_fallthru
        _
      %p244 = scmp.lt.s32.totalorder %s18, 8
      // Predicated region
      $region17: #{encoder_layer_forward.4} parent=5 // pred_check
        %p245 = pneg %p244
      $region18: #{encoder_layer_forward.4} parent=5 // pred_check_branch
        %247 = sbr.rel (%p245) target = $region20
      $region19: #{encoder_layer_forward.4} parent=5 // pred_region
        // Predicated region
        $region21: #{encoder_layer_forward.4} parent=19 // pred_check
          %p248 = pneg %p61
        $region22: #{encoder_layer_forward.4} parent=19 // pred_check_branch
          %250 = sbr.rel (%p248) target = $region24
        $region23: #{encoder_layer_forward.4} parent=19 // pred_region
          %p251 = scmp.lt.s32.totalorder %s25, 1
          %s252 = scalar_select %p251, %s25, 1
          %p253 = scmp.lt.s32.totalorder %s27, 3
          %s254 = scalar_select %p253, %s27, 3
          %p255 = scmp.lt.s32.totalorder %s26, 0
          %s256 = scalar_select %p255, %s26, 0
          %s257 = sadd.s32 %s256, %s254
          %s258 = smul.addr %s252, 4
          %s259 = sadd.s32 %s257, %s258
          %s260 = smul.addr %s259, 4
          %s261 = scalar_lea.vmem %s0, %s260
        $region24: #{encoder_layer_forward.4} parent=19 // pred_fallthru
          _
        // Predicated region
        $region25: #{encoder_layer_forward.4} parent=19 // pred_check
          %p262 = pneg %p89
        $region26: #{encoder_layer_forward.4} parent=19 // pred_check_branch
          %264 = sbr.rel (%p262) target = $region28
        $region27: #{encoder_layer_forward.4} parent=19 // pred_region
          %p265 = scmp.lt.s32.totalorder %s25, 1
          %s266 = scalar_select %p265, %s25, 1
          %p267 = scmp.lt.s32.totalorder %s27, 3
          %s268 = scalar_select %p267, %s27, 3
          %s269 = smul.addr %s266, 4
          %s270 = sadd.s32 %s268, %s269
          %s271 = smul.addr %s270, 4
          %s272 = scalar_lea.vmem %s1, %s271
        $region28: #{encoder_layer_forward.4} parent=19 // pred_fallthru
          _
        // Predicated region
        $region29: #{encoder_layer_forward.4} parent=19 // pred_check
          %p273 = pneg %p117
        $region30: #{encoder_layer_forward.4} parent=19 // pred_check_branch
          %275 = sbr.rel (%p273) target = $region32
        $region31: #{encoder_layer_forward.4} parent=19 // pred_region
          %p276 = scmp.lt.s32.totalorder %s25, 1
          %s277 = scalar_select %p276, %s25, 1
          %p278 = scmp.lt.s32.totalorder %s27, 3
          %s279 = scalar_select %p278, %s27, 3
          %s280 = smul.addr %s277, 4
          %s281 = sadd.s32 %s279, %s280
          %s282 = smul.addr %s281, 4
          %s283 = scalar_lea.vmem %s2, %s282
        $region32: #{encoder_layer_forward.4} parent=19 // pred_fallthru
          _
        // Predicated region
        $region33: #{encoder_layer_forward.4} parent=19 // pred_check
          %p284 = pneg %p145
        $region34: #{encoder_layer_forward.4} parent=19 // pred_check_branch
          %286 = sbr.rel (%p284) target = $region36
        $region35: #{encoder_layer_forward.4} parent=19 // pred_region
          %s287 = sand.u32 %s135, 1
          %s288 = scalar_lea.sflag [#allocation4], %s287
          %s289 = sand.u32 %s135, 1
          %s290 = smul.addr %s289, 8
          %s291 = scalar_lea.vmem [#allocation3], %s290
          %293 = vsyncadd %s288, 0
          %s294 = sadd.s32 %s26, %s25
          %s295 = smul.addr %s294, 8
          %s296 = scalar_lea.hbm %s3, %s295
          %s298 = sshll.u32 %s296, 4
          %s299 = int_to_ptr.hbm [resolvable:$true] %s298
          %s300 = sshll.u32 %s291, 4
          %s301 = int_to_ptr.vmem [resolvable:$true] %s300
          %303 = dma.hbm_to_vmem [thread:$0]  %s299, 128, %s301, %s288
        $region36: #{encoder_layer_forward.4} parent=19 // pred_fallthru
          _
        // Predicated region
        $region37: #{encoder_layer_forward.4} parent=19 // pred_check
          %p304 = pneg %p171
        $region38: #{encoder_layer_forward.4} parent=19 // pred_check_branch
          %306 = sbr.rel (%p304) target = $region40
        $region39: #{encoder_layer_forward.4} parent=19 // pred_region
          %s307 = sand.u32 %s161, 1
          %s308 = scalar_lea.sflag [#allocation6], %s307
          %s309 = sand.u32 %s161, 1
          %s310 = smul.addr %s309, 4
          %s311 = scalar_lea.vmem [#allocation5], %s310
          %313 = vsyncadd %s308, 0
          %s314 = smul.addr %s27, 4
          %s315 = scalar_lea.hbm %s4, %s314
          %s317 = sshll.u32 %s315, 4
          %s318 = int_to_ptr.hbm [resolvable:$true] %s317
          %s319 = sshll.u32 %s311, 4
          %s320 = int_to_ptr.vmem [resolvable:$true] %s319
          %322 = dma.hbm_to_vmem [thread:$0]  %s318, 64, %s320, %s308
        $region40: #{encoder_layer_forward.4} parent=19 // pred_fallthru
          _
      $region20: #{encoder_layer_forward.4} parent=5 // pred_fallthru
        _
      %p323 = scmp.le.s32.totalorder 1, %s18
      %p324 = scmp.lt.s32.totalorder %s18, 9
      %p325 = pnand %p323, %p324
      %p326 = pneg %p325
      // Predicated region
      $region41: #{encoder_layer_forward.4} parent=5 // pred_check
        _
      $region42: #{encoder_layer_forward.4} parent=5 // pred_check_branch
        %328 = sbr.rel (%p325) target = $region44
      $region43: #{encoder_layer_forward.4} parent=5 // pred_region
        %s329 = ssub.s32 %s18, 1
        %s330 = sand.u32 %s138, 1
        %s331 = scalar_lea.sflag [#allocation4], %s330
        %s332 = sand.u32 %s138, 1
        %s333 = smul.addr %s332, 8
        %s334 = scalar_lea.vmem [#allocation3], %s333
        // Predicated region
        $region45: #{encoder_layer_forward.4} parent=43 // pred_check
          %p335 = pneg %p151
        $region46: #{encoder_layer_forward.4} parent=43 // pred_check_branch
          %337 = sbr.rel (%p335) target = $region48
        $region47: #{encoder_layer_forward.4} parent=43 // pred_region
          %339 = dma.done %s331, 128
        $region48: #{encoder_layer_forward.4} parent=43 // pred_fallthru
          _
        %s340 = sand.u32 %s164, 1
        %s341 = scalar_lea.sflag [#allocation6], %s340
        %s342 = sand.u32 %s164, 1
        %s343 = smul.addr %s342, 4
        %s344 = scalar_lea.vmem [#allocation5], %s343
        // Predicated region
        $region49: #{encoder_layer_forward.4} parent=43 // pred_check
          %p345 = pneg %p177
        $region50: #{encoder_layer_forward.4} parent=43 // pred_check_branch
          %347 = sbr.rel (%p345) target = $region52
        $region51: #{encoder_layer_forward.4} parent=43 // pred_region
          %349 = dma.done %s341, 64
        $region52: #{encoder_layer_forward.4} parent=43 // pred_fallthru
          _
        %p350 = scmp.lt.s32.totalorder %s28, 1
        %s351 = scalar_select %p350, %s28, 1
        %p352 = scmp.lt.s32.totalorder %s30, 3
        %s353 = scalar_select %p352, %s30, 3
        %p354 = scmp.lt.s32.totalorder %s29, 0
        %s355 = scalar_select %p354, %s29, 0
        %s356 = sadd.s32 %s355, %s353
        %s357 = smul.addr %s351, 4
        %s358 = sadd.s32 %s356, %s357
        %s359 = smul.addr %s358, 4
        %s360 = scalar_lea.vmem %s0, %s359
        %p361 = pneg %p67
        %p362 = pneg %p64
        %p363 = scmp.lt.s32.totalorder %s28, 1
        %s364 = scalar_select %p363, %s28, 1
        %p365 = scmp.lt.s32.totalorder %s30, 3
        %s366 = scalar_select %p365, %s30, 3
        %s367 = smul.addr %s364, 4
        %s368 = sadd.s32 %s366, %s367
        %s369 = smul.addr %s368, 4
        %s370 = scalar_lea.vmem %s1, %s369
        %p371 = pneg %p95
        %p372 = pneg %p92
        %p373 = scmp.lt.s32.totalorder %s28, 1
        %s374 = scalar_select %p373, %s28, 1
        %p375 = scmp.lt.s32.totalorder %s30, 3
        %s376 = scalar_select %p375, %s30, 3
        %s377 = smul.addr %s374, 4
        %s378 = sadd.s32 %s376, %s377
        %s379 = smul.addr %s378, 4
        %s380 = scalar_lea.vmem %s2, %s379
        %p381 = pneg %p123
        %p382 = pneg %p120
        %s383 = sand.u32 %s138, 1
        %s384 = scalar_lea.sflag [#allocation4], %s383
        %s385 = sand.u32 %s138, 1
        %s386 = smul.addr %s385, 8
        %s387 = scalar_lea.vmem [#allocation3], %s386
        %p388 = pneg %p151
        %p389 = pneg %p148
        %s390 = sand.u32 %s164, 1
        %s391 = scalar_lea.sflag [#allocation6], %s390
        %s392 = sand.u32 %s164, 1
        %s393 = smul.addr %s392, 4
        %s394 = scalar_lea.vmem [#allocation5], %s393
        %p395 = pneg %p177
        %p396 = pneg %p174
        %p397 = pneg %p198
        %p398 = pneg %p195
        %p399 = pneg %p226
        %p400 = pneg %p223
        %p401 = scmp.lt.s32.totalorder %s28, 1
        %s402 = scalar_select %p401, %s28, 1
        %p403 = scmp.lt.s32.totalorder %s29, 0
        %s404 = scalar_select %p403, %s29, 0
        %s405 = sadd.s32 %s404, %s402
        %s406 = smul.addr %s405, 8
        %s407 = scalar_lea.vmem %s6, %s406
        %p408 = scmp.lt.s32.totalorder %s28, 1
        %s409 = scalar_select %p408, %s28, 1
        %p410 = scmp.lt.s32.totalorder %s30, 3
        %s411 = scalar_select %p410, %s30, 3
        %p412 = scmp.lt.s32.totalorder %s29, 0
        %s413 = scalar_select %p412, %s29, 0
        %s414 = sadd.s32 %s413, %s411
        %s415 = smul.addr %s409, 4
        %s416 = sadd.s32 %s414, %s415
        %s417 = smul.addr %s416, 4
        %s418 = scalar_lea.vmem %s0, %s417
        %p419 = scmp.lt.s32.totalorder %s28, 1
        %s420 = scalar_select %p419, %s28, 1
        %p421 = scmp.lt.s32.totalorder %s30, 3
        %s422 = scalar_select %p421, %s30, 3
        %s423 = smul.addr %s420, 4
        %s424 = sadd.s32 %s422, %s423
        %s425 = smul.addr %s424, 4
        %s426 = scalar_lea.vmem %s1, %s425
        %p427 = scmp.lt.s32.totalorder %s28, 1
        %s428 = scalar_select %p427, %s28, 1
        %p429 = scmp.lt.s32.totalorder %s30, 3
        %s430 = scalar_select %p429, %s30, 3
        %s431 = smul.addr %s428, 4
        %s432 = sadd.s32 %s430, %s431
        %s433 = smul.addr %s432, 4
        %s434 = scalar_lea.vmem %s2, %s433
        %p435 = scmp.lt.s32.totalorder %s28, 1
        %s436 = scalar_select %p435, %s28, 1
        %p437 = scmp.lt.s32.totalorder %s29, 0
        %s438 = scalar_select %p437, %s29, 0
        %s439 = sadd.s32 %s438, %s436
        %s440 = smul.addr %s439, 8
        %s441 = scalar_lea.vmem %s6, %s440
        %p443 = scmp.eq.s32.totalorder %s30, 0
        // Predicated region
        $region53: #{encoder_layer_forward.4} parent=43 // pred_check
          %p444 = pneg %p443
        $region54: #{encoder_layer_forward.4} parent=43 // pred_check_branch
          %446 = sbr.rel (%p444) target = $region56
        $region55: #{encoder_layer_forward.4} parent=43 // pred_region
          %v447 = vld [vmem:[%s334] sm:$0xff]
          %v448 = vld [vmem:[%s5] sm:$0x1]
          %v450 = vperm.slane %v448, 0
          %v452 = vadd.f32 %v447, %v450
          %vm453 = vcmask 261120
          %454 = vst.msk [vmem:[#allocation2] sm:$0xff] %vm453, %v452
        $region56: #{encoder_layer_forward.4} parent=43 // pred_fallthru
          _
        %v455 = vld [vmem:[%s418] sm:$0xf]
        %v456 = vld [vmem:[%s426] sm:$0xf]
        %v457 = vld [vmem:[%s434] sm:$0xf]
        %vm458 = vcmask 64512
        %v460 = vsel %vm458, %v455, 0
        %v463 = vsel %vm458, %v456, 0
        %465 = vmatpush.bf16.xpose.msra.mxu0 0
        %466 = vmatpush.bf16.xpose.msra.mxu0 0
        %467 = vmatpush.bf16.xpose.msra.mxu0 0
        %468 = vmatpush.bf16.xpose.msra.mxu0 0
        %469 = vmatpush.bf16.xpose.msra.mxu0 0
        %470 = vmatpush.bf16.xpose.msra.mxu0 0
        %471 = vmatpush.bf16.xpose.msra.mxu0 0
        %472 = vmatpush.bf16.xpose.msra.mxu0 %v463
        %473 = vmatmul.bf16.gmra.mxu0 %v460
        %v474 = vpop.f32.mrf.mxu0
        %v475 = vadd.f32 0.0, %v474
        %v476 = vpop.f32.mrf.mxu0
        %477 = vdwg.mxu0
        %v478 = vmul.f32 %v475, 0.35355338
        %v479 = vsel %vm458, %v478, -inf
        %480 = vmax.xlane.f32.xlu0 %v479
        %v481 = vpop.xlane.xlu0 %480
        %v482 = vsub.f32 %v478, %v481
        %v483 = vmul.f32 %v482, 1.442695
        %v484 = vpow.pop %v483
        %v485 = vsel %vm458, %v484, 0.0
        %486 = vadd.xlane.f32.xlu0 %v485
        %v487 = vpop.xlane.xlu0 %486
        %v488 = vrcp.pop %v487
        %v489 = vmul.f32 %v487, %v488
        %v490 = vsub.f32 1.0, %v489
        %v491 = vmul.f32 %v488, %v490
        %v492 = vadd.f32 %v488, %v491
        %vm493 = vweird.f32 %v487
        %vm494 = vweird.f32 %v488
        %vm495 = vmor %vm493, %vm494
        %v496 = vsel %vm495, %v488, %v492
        %v497 = vand.u32 2147483647, %v487
        %vm498 = vcmp.eq.f32.partialorder %v497, 8.507059e+37
        %v499 = vand.u32 %v487, 2147483648
        %v500 = vor.u32 1.1754944e-38, %v499
        %v501 = vsel %vm498, %v500, %v496
        %v502 = vmul.f32 %v484, %v501
        %v503 = vpack.c.bf16 %v502, %v502
        %v505 = vsel %vm458, %v503, 0
        %vm507 = vcmask 1043456
        %v509 = vsel %vm507, %v457, 0
        %511 = vmatpush.bf16.msra.mxu0 0
        %512 = vmatpush.bf16.msra.mxu0 0
        %513 = vmatpush.bf16.msra.mxu0 0
        %514 = vmatpush.bf16.msra.mxu0 0
        %515 = vmatpush.bf16.msra.mxu0 0
        %516 = vmatpush.bf16.msra.mxu0 0
        %517 = vmatpush.bf16.msra.mxu0 0
        %518 = vmatpush.bf16.msra.mxu0 %v509
        %519 = vmatmul.bf16.gmra.mxu0 %v505
        %v520 = vpop.f32.mrf.mxu0
        %v521 = vadd.f32 0.0, %v520
        %v522 = vpop.f32.mrf.mxu0
        %523 = vdwg.mxu0
        %v524 = vld [vmem:[#allocation2] sm:$0xff]
        %v525 = vpack.c.bf16 %v521, %v521
        %v526 = vld [vmem:[%s344] sm:$0xf]
        %v528 = vsel %vm458, %v525, 0
        %v531 = vsel %vm507, %v526, 0
        %533 = vmatpush.bf16.msra.mxu0 0
        %534 = vmatpush.bf16.msra.mxu0 0
        %535 = vmatpush.bf16.msra.mxu0 0
        %536 = vmatpush.bf16.msra.mxu0 0
        %537 = vmatpush.bf16.msra.mxu0 0
        %538 = vmatpush.bf16.msra.mxu0 0
        %539 = vmatpush.bf16.msra.mxu0 0
        %540 = vmatpush.bf16.msra.mxu0 %v531
        %541 = vmatmul.bf16.gmra.mxu0 %v528
        %v542 = vpop.f32.mrf.mxu0
        %v543 = vadd.f32 0.0, %v542
        %v544 = vpop.f32.mrf.mxu0
        %545 = vdwg.mxu0
        %v546 = vadd.f32 %v524, %v543
        %vm547 = vcmask 261120
        %548 = vst.msk [vmem:[#allocation2] sm:$0xff] %vm547, %v546
        %p549 = scmp.eq.s32.totalorder %s30, 3
        // Predicated region
        $region57: #{encoder_layer_forward.4} parent=43 // pred_check
          %p550 = pneg %p549
        $region58: #{encoder_layer_forward.4} parent=43 // pred_check_branch
          %552 = sbr.rel (%p550) target = $region60
        $region59: #{encoder_layer_forward.4} parent=43 // pred_region
          %v553 = vld [vmem:[#allocation2] sm:$0xff]
          %554 = vst.msk [vmem:[%s441] sm:$0xff] %vm547, %v553
        $region60: #{encoder_layer_forward.4} parent=43 // pred_fallthru
          _
        %p555 = scmp.lt.s32.totalorder %s28, 1
        %s556 = scalar_select %p555, %s28, 1
        %p557 = scmp.lt.s32.totalorder %s29, 0
        %s558 = scalar_select %p557, %s29, 0
        %s559 = sadd.s32 %s558, %s556
        %s560 = smul.addr %s559, 8
        %s561 = scalar_lea.vmem %s6, %s560
        // Predicated region
        $region61: #{encoder_layer_forward.4} parent=43 // pred_check
          %p562 = pneg %p223
        $region62: #{encoder_layer_forward.4} parent=43 // pred_check_branch
          %564 = sbr.rel (%p562) target = $region64
        $region63: #{encoder_layer_forward.4} parent=43 // pred_region
          _
        $region64: #{encoder_layer_forward.4} parent=43 // pred_fallthru
          _
      $region44: #{encoder_layer_forward.4} parent=5 // pred_fallthru
        _
      %p565 = scmp.le.s32.totalorder 2, %s18
      // Predicated region
      $region65: #{encoder_layer_forward.4} parent=5 // pred_check
        %p566 = pneg %p565
      $region66: #{encoder_layer_forward.4} parent=5 // pred_check_branch
        %568 = sbr.rel (%p566) target = $region68
      $region67: #{encoder_layer_forward.4} parent=5 // pred_region
        %s569 = ssub.s32 %s18, 2
        // Predicated region
        $region69: #{encoder_layer_forward.4} parent=67 // pred_check
          %p570 = pneg %p229
        $region70: #{encoder_layer_forward.4} parent=67 // pred_check_branch
          %572 = sbr.rel (%p570) target = $region72
        $region71: #{encoder_layer_forward.4} parent=67 // pred_region
          %p573 = scmp.lt.s32.totalorder %s31, 1
          %s574 = scalar_select %p573, %s31, 1
          %p575 = scmp.lt.s32.totalorder %s32, 0
          %s576 = scalar_select %p575, %s32, 0
          %s577 = sadd.s32 %s576, %s574
          %s578 = smul.addr %s577, 8
          %s579 = scalar_lea.vmem %s6, %s578
        $region72: #{encoder_layer_forward.4} parent=67 // pred_fallthru
          _
      $region68: #{encoder_layer_forward.4} parent=5 // pred_fallthru
        _
    $region6: #{encoder_layer_forward.4} parent=1 // loop_footer
      %s22 = sadd.s32 1, %s18
    $region7: #{encoder_layer_forward.4} parent=1 // loop_footer_branch
      %17 = sbr.rel target = $region3
    $region8: #{encoder_layer_forward.4} parent=1 // loop_exit
      _
    %580 = vsyncpa [#allocation4], 1
    %s581 = scalar_lea.sflag [#allocation4], 1
    %582 = vsyncpa %s581, 1
    %583 = vsyncpa [#allocation6], 1
    %s584 = scalar_lea.sflag [#allocation6], 1
    %585 = vsyncpa %s584, 1

// kernel: encoder_layer_forward.5
$region0: #{encoder_layer_forward.5}
  #allocation0 [shape = 'u32[]', space=smem, size = 0x4, offset = 0x4, fixed_abs, tag = 'smem constant byte address 0x4 - core index']
  #allocation1 [shape = 'u32[72,128]{1,0:T(1,128)}', space=vmem, size = 0x9000, scoped, tag = 'internal scratch']
  #allocation2 [shape = 'bf16[16,32]{1,0:T(8,128)(2,1)}', space=vmem, size = 0x1000, scoped, tag = 'scratch operand']
  #allocation3 [shape = 'f32[16,32]{1,0:T(8,128)}', space=vmem, size = 0x2000, scoped, tag = 'scratch operand']
  %s0 = inlined_call_operand.vmem [shape: f32[16,32], index: 0, kind: input, shape index: {}]
  %s1 = inlined_call_operand.vmem [shape: f32[1,32], index: 1, kind: input, shape index: {}]
  %s2 = inlined_call_operand.vmem [shape: f32[1,32], index: 2, kind: input, shape index: {}]
  %s3 = inlined_call_operand.vmem [shape: bf16[32,128], index: 3, kind: input, shape index: {}]
  %s4 = inlined_call_operand.vmem [shape: f32[1,128], index: 4, kind: input, shape index: {}]
  %s5 = inlined_call_operand.vmem [shape: bf16[128,32], index: 5, kind: input, shape index: {}]
  %s6 = inlined_call_operand.vmem [shape: f32[1,32], index: 6, kind: input, shape index: {}]
  %s7 = inlined_call_operand.hbm [shape: f32[16,32], index: 7, kind: output, shape index: {}]
  %s8 = sld [smem:[#allocation0]]
  $region46: #{encoder_layer_forward.5} parent=0
    _
  %s10 = ssub.s32 1, %s8
  %s11 = scalar_select 0, %s10, %s8
  $region1: #{encoder_layer_forward.5} parent=0
    #allocation4 [shape = 'u8[8192]{0}', space=vmem, size = 0x2000, scoped, tag = 'output window, operand 0, single buffered']
    #allocation5 [shape = 's32[1]{0}', space=sflag, size = 0x4, scoped, tag = 'scoped memory for encoder_layer_forward.5']
    %12 = vsyncpa [#allocation5], 0
    // Predicated region
    $region2: #{encoder_layer_forward.5} parent=1 // pred_check
      _
    $region3: #{encoder_layer_forward.5} parent=1 // pred_check_branch
      %14 = sbr.rel (0) target = $region5
    $region4: #{encoder_layer_forward.5} parent=1 // pred_region
      _
    $region5: #{encoder_layer_forward.5} parent=1 // pred_fallthru
      _
    // Predicated region
    $region6: #{encoder_layer_forward.5} parent=1 // pred_check
      _
    $region7: #{encoder_layer_forward.5} parent=1 // pred_check_branch
      %16 = sbr.rel (0) target = $region9
    $region8: #{encoder_layer_forward.5} parent=1 // pred_region
      _
    $region9: #{encoder_layer_forward.5} parent=1 // pred_fallthru
      _
    // Predicated region
    $region10: #{encoder_layer_forward.5} parent=1 // pred_check
      _
    $region11: #{encoder_layer_forward.5} parent=1 // pred_check_branch
      %18 = sbr.rel (0) target = $region13
    $region12: #{encoder_layer_forward.5} parent=1 // pred_region
      _
    $region13: #{encoder_layer_forward.5} parent=1 // pred_fallthru
      _
    // Predicated region
    $region14: #{encoder_layer_forward.5} parent=1 // pred_check
      _
    $region15: #{encoder_layer_forward.5} parent=1 // pred_check_branch
      %20 = sbr.rel (0) target = $region17
    $region16: #{encoder_layer_forward.5} parent=1 // pred_region
      _
    $region17: #{encoder_layer_forward.5} parent=1 // pred_fallthru
      _
    // Predicated region
    $region18: #{encoder_layer_forward.5} parent=1 // pred_check
      _
    $region19: #{encoder_layer_forward.5} parent=1 // pred_check_branch
      %22 = sbr.rel (0) target = $region21
    $region20: #{encoder_layer_forward.5} parent=1 // pred_region
      _
    $region21: #{encoder_layer_forward.5} parent=1 // pred_fallthru
      _
    // Predicated region
    $region22: #{encoder_layer_forward.5} parent=1 // pred_check
      _
    $region23: #{encoder_layer_forward.5} parent=1 // pred_check_branch
      %24 = sbr.rel (0) target = $region25
    $region24: #{encoder_layer_forward.5} parent=1 // pred_region
      _
    $region25: #{encoder_layer_forward.5} parent=1 // pred_fallthru
      _
    // Predicated region
    $region26: #{encoder_layer_forward.5} parent=1 // pred_check
      _
    $region27: #{encoder_layer_forward.5} parent=1 // pred_check_branch
      %26 = sbr.rel (0) target = $region29
    $region28: #{encoder_layer_forward.5} parent=1 // pred_region
      _
    $region29: #{encoder_layer_forward.5} parent=1 // pred_fallthru
      _
    %p28 = scmp.eq.s32.totalorder 0, 0
    // Predicated region
    $region30: #{encoder_layer_forward.5} parent=1 // pred_check
      %p29 = pneg %p28
    $region31: #{encoder_layer_forward.5} parent=1 // pred_check_branch
      %31 = sbr.rel (%p29) target = $region33
    $region32: #{encoder_layer_forward.5} parent=1 // pred_region
      %v32 = vld [vmem:[%s0] sm:$0xff]
      %v33 = vld [vmem:[%s0 + $0x8] sm:$0xff]
      %vm34 = vcmask 261120
      %v35 = vsel %vm34, %v32, 0.0
      %36 = vadd.xlane.f32.xlu0 %v35
      %v37 = vpop.xlane.xlu0 %36
      %v38 = vsel %vm34, %v33, 0.0
      %39 = vadd.xlane.f32.xlu0 %v38
      %v40 = vpop.xlane.xlu0 %39
      %v41 = vrcp.pop 32.0
      %v42 = vmul.f32 32.0, %v41
      %v43 = vsub.f32 1.0, %v42
      %v44 = vmul.f32 %v41, %v43
      %v45 = vadd.f32 %v41, %v44
      %vm46 = vweird.f32 %v41
      %v47 = vsel %vm46, %v41, %v45
      %v48 = vmul.f32 %v37, %v47
      %v49 = vmul.f32 %v40, %v47
      %v50 = vsub.f32 %v32, %v48
      %v51 = vsub.f32 %v33, %v49
      %v52 = vmul.f32 %v50, %v50
      %v53 = vmul.f32 %v51, %v51
      %v54 = vsel %vm34, %v52, 0.0
      %55 = vadd.xlane.f32.xlu0 %v54
      %v56 = vpop.xlane.xlu0 %55
      %v57 = vsel %vm34, %v53, 0.0
      %58 = vadd.xlane.f32.xlu0 %v57
      %v59 = vpop.xlane.xlu0 %58
      %v60 = vmul.f32 %v56, %v47
      %v61 = vmul.f32 %v59, %v47
      %v62 = vadd.f32 %v60, 1e-05
      %v63 = vadd.f32 %v61, 1e-05
      %v64 = vrsqrt.pop %v62
      %v65 = vmul.f32 %v64, %v62
      %v66 = vmul.f32 %v65, %v64
      %v67 = vmul.f32 0.5, %v66
      %v68 = vsub.f32 1.5, %v67
      %v69 = vmul.f32 %v64, %v68
      %vm70 = vweird.f32 %v62
      %vm71 = vweird.f32 %v64
      %vm72 = vmor %vm70, %vm71
      %v73 = vsel %vm72, %v64, %v69
      %v74 = vrsqrt.pop %v63
      %v75 = vmul.f32 %v74, %v63
      %v76 = vmul.f32 %v75, %v74
      %v77 = vmul.f32 0.5, %v76
      %v78 = vsub.f32 1.5, %v77
      %v79 = vmul.f32 %v74, %v78
      %vm80 = vweird.f32 %v63
      %vm81 = vweird.f32 %v74
      %vm82 = vmor %vm80, %vm81
      %v83 = vsel %vm82, %v74, %v79
      %v84 = vmul.f32 %v50, %v73
      %v85 = vmul.f32 %v51, %v83
      %v86 = vld [vmem:[%s1] sm:$0x1]
      %v88 = vperm.slane %v86, 0
      %v90 = vmul.f32 %v84, %v88
      %v91 = vmul.f32 %v85, %v88
      %v92 = vld [vmem:[%s2] sm:$0x1]
      %v94 = vperm.slane %v92, 0
      %v96 = vadd.f32 %v90, %v94
      %v97 = vadd.f32 %v91, %v94
      %v98 = vpack.c.bf16 %v96, %v96
      %v99 = vpack.c.bf16 %v97, %v97
      %vm100 = vcmask 257024
      %101 = vst.msk [vmem:[#allocation2] sm:$0xf] %vm100, %v98
      %102 = vst.msk [vmem:[#allocation2 + $0x4] sm:$0xf] %vm100, %v99
      %v103 = vld [vmem:[%s6] sm:$0x1]
      %v105 = vperm.slane %v103, 0
      %v107 = vadd.f32 %v32, %v105
      %v108 = vadd.f32 %v33, %v105
      %109 = vst.msk [vmem:[#allocation3] sm:$0xff] %vm34, %v107
      %110 = vst.msk [vmem:[#allocation3 + $0x8] sm:$0xff] %vm34, %v108
    $region33: #{encoder_layer_forward.5} parent=1 // pred_fallthru
      _
    %v111 = vld [vmem:[#allocation2] sm:$0xf]
    %v112 = vld [vmem:[#allocation2 + $0x4] sm:$0xf]
    %v113 = vld [vmem:[%s3] sm:$0xf]
    %v114 = vld [vmem:[%s3 + $0x4] sm:$0xf]
    %v115 = vld [vmem:[%s3 + $0x8] sm:$0xf]
    %v116 = vld [vmem:[%s3 + $0xc] sm:$0xf]
    %v117 = vld [vmem:[%s4] sm:$0x1]
    %v119 = vperm.slane %v117, 0
    %v123 = vunpack.c.l.b16 %v111
    %v124 = vunpack.c.l.b16 %v112
    %v125 = vpack.c.b16 %v124, %v123
    %v130 = vunpack.c.l.b16 %v113
    %v131 = vunpack.c.l.b16 %v114
    %v132 = vunpack.c.l.b16 %v115
    %v133 = vunpack.c.l.b16 %v116
    %v134 = vpack.c.b16 %v131, %v130
    %v135 = vpack.c.b16 %v133, %v132
    %vm138 = vcmask 261120
    %v140 = vsel %vm138, %v125, 0
    %142 = vmatpush.bf16.msra.mxu0 0
    %143 = vmatpush.bf16.msra.mxu0 0
    %144 = vmatpush.bf16.msra.mxu0 0
    %145 = vmatpush.bf16.msra.mxu0 0
    %146 = vmatpush.bf16.msra.mxu0 0
    %147 = vmatpush.bf16.msra.mxu0 0
    %148 = vmatpush.bf16.msra.mxu0 %v135
    %149 = vmatpush.bf16.msra.mxu0 %v134
    %150 = vmatmul.bf16.gmra.mxu0 %v140
    %v151 = vpop.f32.mrf.mxu0
    %v152 = vadd.f32 %v119, %v151
    %v153 = vpop.f32.mrf.mxu0
    %v154 = vadd.f32 %v119, %v153
    %155 = vdwg.mxu0
    %v156 = vmul.f32 %v152, -1.702
    %v157 = vmul.f32 %v154, -1.702
    %v158 = vmul.f32 %v156, 1.442695
    %v159 = vpow.pop %v158
    %v160 = vmul.f32 %v157, 1.442695
    %v161 = vpow.pop %v160
    %v162 = vadd.f32 %v159, 1.0
    %v163 = vadd.f32 %v161, 1.0
    %v164 = vrcp.pop %v162
    %v165 = vmul.f32 %v162, %v164
    %v166 = vsub.f32 1.0, %v165
    %v167 = vmul.f32 %v164, %v166
    %v168 = vadd.f32 %v164, %v167
    %vm169 = vweird.f32 %v162
    %vm170 = vweird.f32 %v164
    %vm171 = vmor %vm169, %vm170
    %v172 = vsel %vm171, %v164, %v168
    %v173 = vand.u32 2147483647, %v162
    %vm174 = vcmp.eq.f32.partialorder %v173, 8.507059e+37
    %v175 = vand.u32 %v162, 2147483648
    %v176 = vor.u32 1.1754944e-38, %v175
    %v177 = vsel %vm174, %v176, %v172
    %v178 = vmul.f32 %v152, %v177
    %v179 = vrcp.pop %v163
    %v180 = vmul.f32 %v163, %v179
    %v181 = vsub.f32 1.0, %v180
    %v182 = vmul.f32 %v179, %v181
    %v183 = vadd.f32 %v179, %v182
    %vm184 = vweird.f32 %v163
    %vm185 = vweird.f32 %v179
    %vm186 = vmor %vm184, %vm185
    %v187 = vsel %vm186, %v179, %v183
    %v188 = vand.u32 2147483647, %v163
    %vm189 = vcmp.eq.f32.partialorder %v188, 8.507059e+37
    %v190 = vand.u32 %v163, 2147483648
    %v191 = vor.u32 1.1754944e-38, %v190
    %v192 = vsel %vm189, %v191, %v187
    %v193 = vmul.f32 %v154, %v192
    %v194 = vld [vmem:[#allocation3] sm:$0xff]
    %v195 = vld [vmem:[#allocation3 + $0x8] sm:$0xff]
    %v196 = vpack.c.bf16 %v193, %v178
    %v197 = vld [vmem:[%s5] sm:$0xf]
    %v198 = vld [vmem:[%s5 + $0x4] sm:$0xf]
    %v199 = vld [vmem:[%s5 + $0x8] sm:$0xf]
    %v200 = vld [vmem:[%s5 + $0xc] sm:$0xf]
    %v201 = vld [vmem:[%s5 + $0x10] sm:$0xf]
    %v202 = vld [vmem:[%s5 + $0x14] sm:$0xf]
    %v203 = vld [vmem:[%s5 + $0x18] sm:$0xf]
    %v204 = vld [vmem:[%s5 + $0x1c] sm:$0xf]
    %v205 = vld [vmem:[%s5 + $0x20] sm:$0xf]
    %v206 = vld [vmem:[%s5 + $0x24] sm:$0xf]
    %v207 = vld [vmem:[%s5 + $0x28] sm:$0xf]
    %v208 = vld [vmem:[%s5 + $0x2c] sm:$0xf]
    %v209 = vld [vmem:[%s5 + $0x30] sm:$0xf]
    %v210 = vld [vmem:[%s5 + $0x34] sm:$0xf]
    %v211 = vld [vmem:[%s5 + $0x38] sm:$0xf]
    %v212 = vld [vmem:[%s5 + $0x3c] sm:$0xf]
    %v229 = vunpack.c.l.b16 %v197
    %v230 = vunpack.c.l.b16 %v198
    %v231 = vunpack.c.l.b16 %v199
    %v232 = vunpack.c.l.b16 %v200
    %v233 = vunpack.c.l.b16 %v201
    %v234 = vunpack.c.l.b16 %v202
    %v235 = vunpack.c.l.b16 %v203
    %v236 = vunpack.c.l.b16 %v204
    %v237 = vunpack.c.l.b16 %v205
    %v238 = vunpack.c.l.b16 %v206
    %v239 = vunpack.c.l.b16 %v207
    %v240 = vunpack.c.l.b16 %v208
    %v241 = vunpack.c.l.b16 %v209
    %v242 = vunpack.c.l.b16 %v210
    %v243 = vunpack.c.l.b16 %v211
    %v244 = vunpack.c.l.b16 %v212
    %v245 = vpack.c.b16 %v230, %v229
    %v246 = vpack.c.b16 %v232, %v231
    %v247 = vpack.c.b16 %v234, %v233
    %v248 = vpack.c.b16 %v236, %v235
    %v249 = vpack.c.b16 %v238, %v237
    %v250 = vpack.c.b16 %v240, %v239
    %v251 = vpack.c.b16 %v242, %v241
    %v252 = vpack.c.b16 %v244, %v243
    %261 = vmatpush.bf16.msra.mxu0 %v252
    %262 = vmatpush.bf16.msra.mxu0 %v251
    %263 = vmatpush.bf16.msra.mxu0 %v250
    %264 = vmatpush.bf16.msra.mxu0 %v249
    %265 = vmatpush.bf16.msra.mxu0 %v248
    %266 = vmatpush.bf16.msra.mxu0 %v247
    %267 = vmatpush.bf16.msra.mxu0 %v246
    %268 = vmatpush.bf16.msra.mxu0 %v245
    %269 = vmatmul.bf16.gmra.mxu0 %v196
    %v270 = vpop.f32.mrf.mxu0
    %v271 = vadd.f32 0.0, %v270
    %v272 = vpop.f32.mrf.mxu0
    %v273 = vadd.f32 0.0, %v272
    %274 = vdwg.mxu0
    %v275 = vadd.f32 %v194, %v271
    %v276 = vadd.f32 %v195, %v273
    %277 = vst.msk [vmem:[#allocation3] sm:$0xff] %vm138, %v275
    %278 = vst.msk [vmem:[#allocation3 + $0x8] sm:$0xff] %vm138, %v276
    // Predicated region
    $region34: #{encoder_layer_forward.5} parent=1 // pred_check
      %p279 = pneg %p28
    $region35: #{encoder_layer_forward.5} parent=1 // pred_check_branch
      %281 = sbr.rel (%p279) target = $region37
    $region36: #{encoder_layer_forward.5} parent=1 // pred_region
      %v282 = vld [vmem:[#allocation3] sm:$0xff]
      %v283 = vld [vmem:[#allocation3 + $0x8] sm:$0xff]
      %284 = vst.msk [vmem:[#allocation4] sm:$0xff] %vm138, %v282
      %285 = vst.msk [vmem:[#allocation4 + $0x8] sm:$0xff] %vm138, %v283
    $region37: #{encoder_layer_forward.5} parent=1 // pred_fallthru
      _
    // Predicated region
    $region38: #{encoder_layer_forward.5} parent=1 // pred_check
      _
    $region39: #{encoder_layer_forward.5} parent=1 // pred_check_branch
      %287 = sbr.rel (0) target = $region41
    $region40: #{encoder_layer_forward.5} parent=1 // pred_region
      %289 = vsyncadd [#allocation5], 0
      %s290 = sshll.u32 [#allocation4], 4
      %s291 = int_to_ptr.vmem [resolvable:$true] %s290
      %s292 = sshll.u32 %s7, 4
      %s293 = int_to_ptr.hbm [resolvable:$true] %s292
      %298 = dma.vmem_to_hbm [thread:$0]  %s291, 256, %s293, [#allocation5], 128, 128, 8
    $region41: #{encoder_layer_forward.5} parent=1 // pred_fallthru
      _
    // Predicated region
    $region42: #{encoder_layer_forward.5} parent=1 // pred_check
      _
    $region43: #{encoder_layer_forward.5} parent=1 // pred_check_branch
      %300 = sbr.rel (0) target = $region45
    $region44: #{encoder_layer_forward.5} parent=1 // pred_region
      %302 = dma.done [#allocation5], 256
    $region45: #{encoder_layer_forward.5} parent=1 // pred_fallthru
      _
    %303 = vsyncpa [#allocation5], 1

</llo_original>
